<compile_context>
chip_gen: v5e
topology: v5e:2x2
jax: 0.10.0
libtpu: 0.0.40
codegen_flags: <defaults>
</compile_context>

<pallas_src>
import jax
import jax.numpy as jnp
import numpy as np
from jax.experimental import pallas as pl
from jax.experimental.pallas import tpu as pltpu

_LANE_PACK = 2  # images packed side-by-side on the lane axis


# -----------------------------------------------------------------------------
# Fused kernel: one batched row-slab (2*R images) per grid step.
#   x_ref  : (1, M, Lin)       M = R*H rows, Lin = 2*W*Cin lanes
#   su_ref : (M, M)            "row above" shift matrix (zero at image tops)
#   sd_ref : (M, M)            "row below" shift matrix (zero at image bottoms)
#   t1_ref : (3, Lin, Lmid)    conv1 banded lane matrices (block-diag, 2 images)
#   b1_ref : (1, Lmid)         conv1 bias tiled over W and both images
#   t2_ref : (3, Lmid, Lout)   conv2 band matrices with 2x column-pool folded in
#   pru_ref: (M/2, M)          row-pool @ su   (pool + up-shift, group-aware)
#   pr_ref : (M/2, M)          row-pool (0.5 entries, block-diag over groups)
#   prd_ref: (M/2, M)          row-pool @ sd
#   tb_ref : (Lin, Lout)       2x column-pool fused with the 1x1 bypass conv
#   bf_ref : (1, Lout)         conv2 bias + bypass bias (both survive the pools)
#   o_ref  : (1, M/2, Lout)    pooled residual output (lane-dense, 128 lanes)
# -----------------------------------------------------------------------------
def _fused_block_kernel(x_ref, su_ref, sd_ref, t1_ref, b1_ref, t2_ref,
                        pru_ref, pr_ref, prd_ref, tb_ref, bf_ref, o_ref):
    f32 = jnp.float32
    X = x_ref[0]                                                    # (M, Lin)

    # ---- conv1 (3x3, pad 1) + bias + ReLU -----------------------------------
    # Vertical neighbors via precomputed shift matmuls (encode zero padding and
    # the per-image boundaries inside the batched slab).
    xu = jnp.dot(su_ref[...], X, preferred_element_type=f32)       # row h-1
    xd = jnp.dot(sd_ref[...], X, preferred_element_type=f32)       # row h+1
    acc1 = (jnp.dot(xu, t1_ref[0], preferred_element_type=f32)
            + jnp.dot(X, t1_ref[1], preferred_element_type=f32)
            + jnp.dot(xd, t1_ref[2], preferred_element_type=f32)
            + b1_ref[...])
    y1 = jnp.maximum(acc1, 0.0)                                     # (M, Lmid)

    # ---- conv2 (3x3, pad 1) with the 2x column pool already folded into t2,
    #      and the vertical shift + 2x row pool folded into pru/pr/prd --------
    z0 = jnp.dot(y1, t2_ref[0], preferred_element_type=f32)         # (M, Lout)
    z1 = jnp.dot(y1, t2_ref[1], preferred_element_type=f32)
    z2 = jnp.dot(y1, t2_ref[2], preferred_element_type=f32)
    main = (jnp.dot(pru_ref[...], z0, preferred_element_type=f32)
            + jnp.dot(pr_ref[...], z1, preferred_element_type=f32)
            + jnp.dot(prd_ref[...], z2, preferred_element_type=f32))  # (M/2, Lout)

    # ---- bypass: 2x2 avg-pool (row pool + pooled 1x1-conv matrix) -----------
    xrows = jnp.dot(pr_ref[...], X, preferred_element_type=f32)     # (M/2, Lin)
    byp = jnp.dot(xrows, tb_ref[...], preferred_element_type=f32)   # (M/2, Lout)

    o_ref[0] = main + byp + bf_ref[...]


# -----------------------------------------------------------------------------
# Host-side, one-time weight repacking (numpy; tiny, not on the hot path).
# -----------------------------------------------------------------------------
def prepare_params(w1_oihw, b1, w2_oihw, b2, wb_oihw, bb, *, H, W,
                   groups_per_step=4):
    assert H % 2 == 0 and W % 2 == 0
    P = _LANE_PACK
    R = groups_per_step
    M = R * H

    w1 = np.transpose(np.asarray(w1_oihw), (2, 3, 1, 0)).astype(np.float32)  # HWIO
    w2 = np.transpose(np.asarray(w2_oihw), (2, 3, 1, 0)).astype(np.float32)
    wb = np.asarray(wb_oihw)[:, :, 0, 0].T.astype(np.float32)                # (Cin,Cout)
    b1 = np.asarray(b1, np.float32)
    b2 = np.asarray(b2, np.float32)
    bb = np.asarray(bb, np.float32)
    Cin, Cout = w1.shape[2], w1.shape[3]
    H2, W2 = H // 2, W // 2

    def band(w_hwio):
        # (3,3,Ci,Co) -> (3, W*Ci, W*Co) Toeplitz-band matrices; out-of-range
        # horizontal taps are omitted == zero-padding semantics.
        Ci, Co = w_hwio.shape[2], w_hwio.shape[3]
        T = np.zeros((3, W * Ci, W * Co), np.float32)
        for ky in range(3):
            for wo in range(W):
                for kx in range(3):
                    wi = wo + kx - 1
                    if 0 <= wi < W:
                        T[ky, wi * Ci:(wi + 1) * Ci, wo * Co:(wo + 1) * Co] = \
                            w_hwio[ky, kx]
        return T

    # 2x column average pool (main path), per image.
    pc = np.zeros((W * Cout, W2 * Cout), np.float32)
    for wo in range(W2):
        for k in range(2):
            for co in range(Cout):
                pc[(2 * wo + k) * Cout + co, wo * Cout + co] = 0.5

    # Bypass: column pool fused with the 1x1 conv, per image.
    tb = np.zeros((W * Cin, W2 * Cout), np.float32)
    for wo in range(W2):
        for k in range(2):
            tb[(2 * wo + k) * Cin:(2 * wo + k + 1) * Cin,
               wo * Cout:(wo + 1) * Cout] = 0.5 * wb

    t1 = band(w1)                                        # (3, W*Cin,  W*Cout)
    t2p = np.einsum('kab,bc->kac', band(w2), pc)         # column pool folded in

    def block_diag2(mat):
        # Lane-pack 2 images: block-diagonal duplication of the lane matrices.
        if mat.ndim == 3:
            k, a, b_ = mat.shape
            out = np.zeros((k, P * a, P * b_), np.float32)
            out[:, :a, :b_] = mat
            out[:, a:, b_:] = mat
        else:
            a, b_ = mat.shape
            out = np.zeros((P * a, P * b_), np.float32)
            out[:a, :b_] = mat
            out[a:, b_:] = mat
        return out

    t1p = block_diag2(t1)            # (3, P*W*Cin,  P*W*Cout)
    t2pp = block_diag2(t2p)          # (3, P*W*Cout, P*W2*Cout)
    tbp = block_diag2(tb)            # (P*W*Cin, P*W2*Cout)

    b1t = np.tile(np.tile(b1, W), P)[None, :]            # (1, P*W*Cout)
    # conv2 bias and bypass bias both pass unchanged through the 2x2 average
    # pools (weights sum to 1), so add them once at the very end.
    bft = np.tile(np.tile(b2 + bb, W2), P)[None, :]      # (1, P*W2*Cout)

    # Vertical +/-1 shift matrices over the batched row slab (M = R*H rows);
    # zeros at image boundaries implement vertical zero padding.
    su = np.zeros((M, M), np.float32)
    sd = np.zeros((M, M), np.float32)
    for p in range(M):
        if p % H != 0:
            su[p, p - 1] = 1.0
        if p % H != H - 1:
            sd[p, p + 1] = 1.0

    # 2x row average pool over the batched slab (block-diag over the R groups).
    pr = np.zeros((R * H2, M), np.float32)
    for r in range(R):
        for h2 in range(H2):
            pr[r * H2 + h2, r * H + 2 * h2] = 0.5
            pr[r * H2 + h2, r * H + 2 * h2 + 1] = 0.5

    return {
        "su": jnp.asarray(su), "sd": jnp.asarray(sd),
        "t1": jnp.asarray(t1p), "b1": jnp.asarray(b1t),
        "t2": jnp.asarray(t2pp),
        "pru": jnp.asarray(pr @ su), "pr": jnp.asarray(pr),
        "prd": jnp.asarray(pr @ sd),
        "tb": jnp.asarray(tbp), "bf": jnp.asarray(bft),
    }


# -----------------------------------------------------------------------------
# Full forward (NCHW in / NCHW out, like the PyTorch module)
# -----------------------------------------------------------------------------
def first_res_block_discriminator(x_nchw, p):
    N, Cin, H, W = x_nchw.shape
    H2, W2 = H // 2, W // 2
    P = _LANE_PACK
    M = p["su"].shape[0]
    R = M // H                       # lane-pairs (groups) per grid step
    M2 = M // 2
    Lin = p["tb"].shape[0]
    Lmid = p["t1"].shape[-1]
    Lout = p["bf"].shape[-1]
    Cout = Lout // (P * W2)
    assert Lin == P * W * Cin

    imgs_per_step = P * R
    Npad = ((N + imgs_per_step - 1) // imgs_per_step) * imgs_per_step
    if Npad != N:                    # pad batch with zero images (sliced off later)
        x_nchw = jnp.concatenate(
            [x_nchw, jnp.zeros((Npad - N, Cin, H, W), x_nchw.dtype)], axis=0)
    grid_n = Npad // imgs_per_step

    # Boundary layout glue only: NCHW -> lane-packed, row-stacked slabs.
    x = jnp.transpose(x_nchw, (0, 2, 3, 1)).reshape(Npad, H, W * Cin)
    x = x.astype(jnp.float32)
    x = x.reshape(Npad // P, P, H, W * Cin).transpose(0, 2, 1, 3)
    x = x.reshape(Npad // P, H, Lin)           # lane = img * W*Cin + w*Cin + ci
    x = x.reshape(grid_n, M, Lin)              # R lane-pairs stacked on rows

    out = pl.pallas_call(
        _fused_block_kernel,
        out_shape=jax.ShapeDtypeStruct((grid_n, M2, Lout), jnp.float32),
        grid=(grid_n,),
        in_specs=[
            pl.BlockSpec((1, M, Lin), lambda n: (n, 0, 0)),       # x row-slab
            pl.BlockSpec((M, M), lambda n: (0, 0)),               # su
            pl.BlockSpec((M, M), lambda n: (0, 0)),               # sd
            pl.BlockSpec((3, Lin, Lmid), lambda n: (0, 0, 0)),    # t1
            pl.BlockSpec((1, Lmid), lambda n: (0, 0)),            # b1
            pl.BlockSpec((3, Lmid, Lout), lambda n: (0, 0, 0)),   # t2 (pooled)
            pl.BlockSpec((M2, M), lambda n: (0, 0)),              # pru
            pl.BlockSpec((M2, M), lambda n: (0, 0)),              # pr
            pl.BlockSpec((M2, M), lambda n: (0, 0)),              # prd
            pl.BlockSpec((Lin, Lout), lambda n: (0, 0)),          # tb
            pl.BlockSpec((1, Lout), lambda n: (0, 0)),            # bf
        ],
        out_specs=pl.BlockSpec((1, M2, Lout), lambda n: (n, 0, 0)),
        compiler_params=pltpu.CompilerParams(
            dimension_semantics=("parallel",),
            vmem_limit_bytes=32 * 1024 * 1024),
    )(x, p["su"], p["sd"], p["t1"], p["b1"], p["t2"],
      p["pru"], p["pr"], p["prd"], p["tb"], p["bf"])

    # Undo lane-packing / row-stacking (wrapper glue), back to NCHW.
    out = out.reshape(grid_n, R, H2, P, W2, Cout).transpose(0, 1, 3, 2, 4, 5)
    out = out.reshape(Npad, H2, W2, Cout)[:N]
    return jnp.transpose(out, (0, 3, 1, 2))


# -----------------------------------------------------------------------------
# Deterministic parameter init (shapes from the module's __init__)
# -----------------------------------------------------------------------------
def xavier_uniform(key, shape_oihw, gain):
    cout, cin, kh, kw = shape_oihw
    fan_in, fan_out = cin * kh * kw, cout * kh * kw
    bound = gain * np.sqrt(6.0 / (fan_in + fan_out))
    return jax.random.uniform(key, shape_oihw, jnp.float32, -bound, bound)


def bias_init(key, fan_in, cout):
    bound = 1.0 / np.sqrt(fan_in)
    return jax.random.uniform(key, (cout,), jnp.float32, -bound, bound)


# -----------------------------------------------------------------------------
# Pure-JAX reference (mirrors the PyTorch forward exactly, NCHW)
# -----------------------------------------------------------------------------
def reference_forward(x, w1, b1, w2, b2, wb, bb):
    def conv(t, w, b, pad):
        y = jax.lax.conv_general_dilated(
            t, w, window_strides=(1, 1), padding=[(pad, pad), (pad, pad)],
            dimension_numbers=("NCHW", "OIHW", "NCHW"),
            precision=jax.lax.Precision.HIGHEST)
        return y + b[None, :, None, None]

    def avgpool2(t):
        n, c, h, w = t.shape
        return t.reshape(n, c, h // 2, 2, w // 2, 2).mean(axis=(3, 5))

    y = jnp.maximum(conv(x, w1, b1, 1), 0.0)
    main = avgpool2(conv(y, w2, b2, 1))
    byp = conv(avgpool2(x), wb, bb, 0)
    return main + byp


if __name__ == "__main__":
    # Small shapes, but a batch big enough to exercise both batching levers:
    # 2 images lane-packed x 4 lane-pairs per step = 8 images/step, grid=(2,)
    # so both v7x TensorCores get a step (on v5e/v6e raise groups_per_step).
    N, Cin, Cout, H, W = 16, 4, 8, 16, 16
    GROUPS_PER_STEP = 4

    key = jax.random.PRNGKey(0)
    k1, k2, k3, k4, k5, k6, kx = jax.random.split(key, 7)

    # PyTorch-layout (OIHW) weights, xavier_uniform gains per the module
    w1_t = xavier_uniform(k1, (Cout, Cin, 3, 3), 1.0)
    w2_t = xavier_uniform(k2, (Cout, Cout, 3, 3), 1.0)
    wb_t = xavier_uniform(k3, (Cout, Cin, 1, 1), float(np.sqrt(2.0)))
    b1 = bias_init(k4, Cin * 9, Cout)
    b2 = bias_init(k5, Cout * 9, Cout)
    bb = bias_init(k6, Cin * 1, Cout)

    x = jax.random.normal(kx, (N, Cin, H, W), jnp.float32)

    params = prepare_params(w1_t, b1, w2_t, b2, wb_t, bb, H=H, W=W,
                            groups_per_step=GROUPS_PER_STEP)

    out = jax.block_until_ready(first_res_block_discriminator(x, params))
    ref = jax.block_until_ready(reference_forward(x, w1_t, b1, w2_t, b2, wb_t, bb))

    assert out.shape == (N, Cout, H // 2, W // 2), out.shape
    if not np.allclose(np.asarray(out), np.asarray(ref), atol=2e-3, rtol=2e-3):
        raise AssertionError("Pallas kernel output mismatches pure-JAX reference")

    print("KERNEL_OK")
</pallas_src>

<mosaic_0001>
module attributes {stable_mosaic.version = 11 : i64} {
  func.func @_fused_block_kernel(%arg0: i32, %arg1: memref<1x64x128xf32, #tpu.memory_space<vmem>>, %arg2: memref<64x64xf32, #tpu.memory_space<vmem>>, %arg3: memref<64x64xf32, #tpu.memory_space<vmem>>, %arg4: memref<3x128x256xf32, #tpu.memory_space<vmem>>, %arg5: memref<1x256xf32, #tpu.memory_space<vmem>>, %arg6: memref<3x256x128xf32, #tpu.memory_space<vmem>>, %arg7: memref<32x64xf32, #tpu.memory_space<vmem>>, %arg8: memref<32x64xf32, #tpu.memory_space<vmem>>, %arg9: memref<32x64xf32, #tpu.memory_space<vmem>>, %arg10: memref<128x128xf32, #tpu.memory_space<vmem>>, %arg11: memref<1x128xf32, #tpu.memory_space<vmem>>, %arg12: memref<1x32x128xf32, #tpu.memory_space<vmem>>) attributes {dimension_semantics = [#tpu.dimension_semantics<parallel>], iteration_bounds = array<i64: 2>, scalar_prefetch = 0 : i64, scratch_operands = 0 : i64, tpu.core_type = #tpu.core_type<tc>, window_params = [{transform_indices = @transform_0, window_bounds = array<i64: 1, 64, 128>}, {pipeline_mode = #tpu.pipeline_mode<synchronous>, transform_indices = @transform_1, window_bounds = array<i64: 64, 64>}, {pipeline_mode = #tpu.pipeline_mode<synchronous>, transform_indices = @transform_2, window_bounds = array<i64: 64, 64>}, {pipeline_mode = #tpu.pipeline_mode<synchronous>, transform_indices = @transform_3, window_bounds = array<i64: 3, 128, 256>}, {pipeline_mode = #tpu.pipeline_mode<synchronous>, transform_indices = @transform_4, window_bounds = array<i64: 1, 256>}, {pipeline_mode = #tpu.pipeline_mode<synchronous>, transform_indices = @transform_5, window_bounds = array<i64: 3, 256, 128>}, {pipeline_mode = #tpu.pipeline_mode<synchronous>, transform_indices = @transform_6, window_bounds = array<i64: 32, 64>}, {pipeline_mode = #tpu.pipeline_mode<synchronous>, transform_indices = @transform_7, window_bounds = array<i64: 32, 64>}, {pipeline_mode = #tpu.pipeline_mode<synchronous>, transform_indices = @transform_8, window_bounds = array<i64: 32, 64>}, {pipeline_mode = #tpu.pipeline_mode<synchronous>, transform_indices = @transform_9, window_bounds = array<i64: 128, 128>}, {pipeline_mode = #tpu.pipeline_mode<synchronous>, transform_indices = @transform_10, window_bounds = array<i64: 1, 128>}, {transform_indices = @transform_11, window_bounds = array<i64: 1, 32, 128>}]} {
    %c0 = arith.constant 0 : index
    %c0_0 = arith.constant 0 : index
    %c0_1 = arith.constant 0 : index
    %0 = vector.load %arg1[%c0, %c0_0, %c0_1] : memref<1x64x128xf32, #tpu.memory_space<vmem>>, vector<1x64x128xf32>
    %1 = vector.shape_cast %0 : vector<1x64x128xf32> to vector<64x128xf32>
    %c0_2 = arith.constant 0 : index
    %c0_3 = arith.constant 0 : index
    %2 = vector.load %arg2[%c0_2, %c0_3] : memref<64x64xf32, #tpu.memory_space<vmem>>, vector<64x64xf32>
    %cst = arith.constant dense<0.000000e+00> : vector<64x128xf32>
    %3 = tpu.matmul %2, %1, %cst {dimension_numbers = #tpu.dot_dimension_numbers<[1], [0], [0], [1], [0, 0, 1, 1], [], []>} : vector<64x64xf32>, vector<64x128xf32>, vector<64x128xf32> -> vector<64x128xf32>
    %c0_4 = arith.constant 0 : index
    %c0_5 = arith.constant 0 : index
    %4 = vector.load %arg3[%c0_4, %c0_5] : memref<64x64xf32, #tpu.memory_space<vmem>>, vector<64x64xf32>
    %cst_6 = arith.constant dense<0.000000e+00> : vector<64x128xf32>
    %5 = tpu.matmul %4, %1, %cst_6 {dimension_numbers = #tpu.dot_dimension_numbers<[1], [0], [0], [1], [0, 0, 1, 1], [], []>} : vector<64x64xf32>, vector<64x128xf32>, vector<64x128xf32> -> vector<64x128xf32>
    %c0_7 = arith.constant 0 : index
    %c0_8 = arith.constant 0 : index
    %c0_9 = arith.constant 0 : index
    %6 = vector.load %arg4[%c0_7, %c0_8, %c0_9] : memref<3x128x256xf32, #tpu.memory_space<vmem>>, vector<1x128x256xf32>
    %7 = vector.shape_cast %6 : vector<1x128x256xf32> to vector<128x256xf32>
    %cst_10 = arith.constant dense<0.000000e+00> : vector<64x256xf32>
    %8 = tpu.matmul %3, %7, %cst_10 {dimension_numbers = #tpu.dot_dimension_numbers<[1], [0], [0], [1], [0, 0, 1, 1], [], []>} : vector<64x128xf32>, vector<128x256xf32>, vector<64x256xf32> -> vector<64x256xf32>
    %c1 = arith.constant 1 : index
    %c0_11 = arith.constant 0 : index
    %c0_12 = arith.constant 0 : index
    %9 = vector.load %arg4[%c1, %c0_11, %c0_12] : memref<3x128x256xf32, #tpu.memory_space<vmem>>, vector<1x128x256xf32>
    %10 = vector.shape_cast %9 : vector<1x128x256xf32> to vector<128x256xf32>
    %cst_13 = arith.constant dense<0.000000e+00> : vector<64x256xf32>
    %11 = tpu.matmul %1, %10, %cst_13 {dimension_numbers = #tpu.dot_dimension_numbers<[1], [0], [0], [1], [0, 0, 1, 1], [], []>} : vector<64x128xf32>, vector<128x256xf32>, vector<64x256xf32> -> vector<64x256xf32>
    %12 = arith.addf %8, %11 : vector<64x256xf32>
    %c2 = arith.constant 2 : index
    %c0_14 = arith.constant 0 : index
    %c0_15 = arith.constant 0 : index
    %13 = vector.load %arg4[%c2, %c0_14, %c0_15] : memref<3x128x256xf32, #tpu.memory_space<vmem>>, vector<1x128x256xf32>
    %14 = vector.shape_cast %13 : vector<1x128x256xf32> to vector<128x256xf32>
    %cst_16 = arith.constant dense<0.000000e+00> : vector<64x256xf32>
    %15 = tpu.matmul %5, %14, %cst_16 {dimension_numbers = #tpu.dot_dimension_numbers<[1], [0], [0], [1], [0, 0, 1, 1], [], []>} : vector<64x128xf32>, vector<128x256xf32>, vector<64x256xf32> -> vector<64x256xf32>
    %16 = arith.addf %12, %15 : vector<64x256xf32>
    %c0_17 = arith.constant 0 : index
    %c0_18 = arith.constant 0 : index
    %17 = vector.load %arg5[%c0_17, %c0_18] : memref<1x256xf32, #tpu.memory_space<vmem>>, vector<1x256xf32>
    %18 = vector.broadcast %17 : vector<1x256xf32> to vector<64x256xf32>
    %19 = arith.addf %16, %18 : vector<64x256xf32>
    %cst_19 = arith.constant 0.000000e+00 : f32
    %20 = vector.broadcast %cst_19 : f32 to vector<64x256xf32>
    %21 = arith.maximumf %19, %20 : vector<64x256xf32>
    %c0_20 = arith.constant 0 : index
    %c0_21 = arith.constant 0 : index
    %c0_22 = arith.constant 0 : index
    %22 = vector.load %arg6[%c0_20, %c0_21, %c0_22] : memref<3x256x128xf32, #tpu.memory_space<vmem>>, vector<1x256x128xf32>
    %23 = vector.shape_cast %22 : vector<1x256x128xf32> to vector<256x128xf32>
    %cst_23 = arith.constant dense<0.000000e+00> : vector<64x128xf32>
    %24 = tpu.matmul %21, %23, %cst_23 {dimension_numbers = #tpu.dot_dimension_numbers<[1], [0], [0], [1], [0, 0, 1, 1], [], []>} : vector<64x256xf32>, vector<256x128xf32>, vector<64x128xf32> -> vector<64x128xf32>
    %c1_24 = arith.constant 1 : index
    %c0_25 = arith.constant 0 : index
    %c0_26 = arith.constant 0 : index
    %25 = vector.load %arg6[%c1_24, %c0_25, %c0_26] : memref<3x256x128xf32, #tpu.memory_space<vmem>>, vector<1x256x128xf32>
    %26 = vector.shape_cast %25 : vector<1x256x128xf32> to vector<256x128xf32>
    %cst_27 = arith.constant dense<0.000000e+00> : vector<64x128xf32>
    %27 = tpu.matmul %21, %26, %cst_27 {dimension_numbers = #tpu.dot_dimension_numbers<[1], [0], [0], [1], [0, 0, 1, 1], [], []>} : vector<64x256xf32>, vector<256x128xf32>, vector<64x128xf32> -> vector<64x128xf32>
    %c2_28 = arith.constant 2 : index
    %c0_29 = arith.constant 0 : index
    %c0_30 = arith.constant 0 : index
    %28 = vector.load %arg6[%c2_28, %c0_29, %c0_30] : memref<3x256x128xf32, #tpu.memory_space<vmem>>, vector<1x256x128xf32>
    %29 = vector.shape_cast %28 : vector<1x256x128xf32> to vector<256x128xf32>
    %cst_31 = arith.constant dense<0.000000e+00> : vector<64x128xf32>
    %30 = tpu.matmul %21, %29, %cst_31 {dimension_numbers = #tpu.dot_dimension_numbers<[1], [0], [0], [1], [0, 0, 1, 1], [], []>} : vector<64x256xf32>, vector<256x128xf32>, vector<64x128xf32> -> vector<64x128xf32>
    %c0_32 = arith.constant 0 : index
    %c0_33 = arith.constant 0 : index
    %31 = vector.load %arg7[%c0_32, %c0_33] : memref<32x64xf32, #tpu.memory_space<vmem>>, vector<32x64xf32>
    %cst_34 = arith.constant dense<0.000000e+00> : vector<32x128xf32>
    %32 = tpu.matmul %31, %24, %cst_34 {dimension_numbers = #tpu.dot_dimension_numbers<[1], [0], [0], [1], [0, 0, 1, 1], [], []>} : vector<32x64xf32>, vector<64x128xf32>, vector<32x128xf32> -> vector<32x128xf32>
    %c0_35 = arith.constant 0 : index
    %c0_36 = arith.constant 0 : index
    %33 = vector.load %arg8[%c0_35, %c0_36] : memref<32x64xf32, #tpu.memory_space<vmem>>, vector<32x64xf32>
    %cst_37 = arith.constant dense<0.000000e+00> : vector<32x128xf32>
    %34 = tpu.matmul %33, %27, %cst_37 {dimension_numbers = #tpu.dot_dimension_numbers<[1], [0], [0], [1], [0, 0, 1, 1], [], []>} : vector<32x64xf32>, vector<64x128xf32>, vector<32x128xf32> -> vector<32x128xf32>
    %35 = arith.addf %32, %34 : vector<32x128xf32>
    %c0_38 = arith.constant 0 : index
    %c0_39 = arith.constant 0 : index
    %36 = vector.load %arg9[%c0_38, %c0_39] : memref<32x64xf32, #tpu.memory_space<vmem>>, vector<32x64xf32>
    %cst_40 = arith.constant dense<0.000000e+00> : vector<32x128xf32>
    %37 = tpu.matmul %36, %30, %cst_40 {dimension_numbers = #tpu.dot_dimension_numbers<[1], [0], [0], [1], [0, 0, 1, 1], [], []>} : vector<32x64xf32>, vector<64x128xf32>, vector<32x128xf32> -> vector<32x128xf32>
    %38 = arith.addf %35, %37 : vector<32x128xf32>
    %c0_41 = arith.constant 0 : index
    %c0_42 = arith.constant 0 : index
    %39 = vector.load %arg8[%c0_41, %c0_42] : memref<32x64xf32, #tpu.memory_space<vmem>>, vector<32x64xf32>
    %cst_43 = arith.constant dense<0.000000e+00> : vector<32x128xf32>
    %40 = tpu.matmul %39, %1, %cst_43 {dimension_numbers = #tpu.dot_dimension_numbers<[1], [0], [0], [1], [0, 0, 1, 1], [], []>} : vector<32x64xf32>, vector<64x128xf32>, vector<32x128xf32> -> vector<32x128xf32>
    %c0_44 = arith.constant 0 : index
    %c0_45 = arith.constant 0 : index
    %41 = vector.load %arg10[%c0_44, %c0_45] : memref<128x128xf32, #tpu.memory_space<vmem>>, vector<128x128xf32>
    %cst_46 = arith.constant dense<0.000000e+00> : vector<32x128xf32>
    %42 = tpu.matmul %40, %41, %cst_46 {dimension_numbers = #tpu.dot_dimension_numbers<[1], [0], [0], [1], [0, 0, 1, 1], [], []>} : vector<32x128xf32>, vector<128x128xf32>, vector<32x128xf32> -> vector<32x128xf32>
    %43 = arith.addf %38, %42 : vector<32x128xf32>
    %c0_47 = arith.constant 0 : index
    %c0_48 = arith.constant 0 : index
    %44 = vector.load %arg11[%c0_47, %c0_48] : memref<1x128xf32, #tpu.memory_space<vmem>>, vector<1x128xf32>
    %45 = vector.broadcast %44 : vector<1x128xf32> to vector<32x128xf32>
    %46 = arith.addf %43, %45 : vector<32x128xf32>
    %c0_49 = arith.constant 0 : index
    %c0_50 = arith.constant 0 : index
    %c0_51 = arith.constant 0 : index
    %47 = vector.load %arg12[%c0_49, %c0_50, %c0_51] : memref<1x32x128xf32, #tpu.memory_space<vmem>>, vector<1x32x128xf32>
    %48 = vector.shape_cast %47 : vector<1x32x128xf32> to vector<32x128xf32>
    %49 = vector.shape_cast %46 : vector<32x128xf32> to vector<1x32x128xf32>
    tpu.vector_store %arg12[%c0_49, %c0_50, %c0_51], %49 {strides = array<i32>} : memref<1x32x128xf32, #tpu.memory_space<vmem>>, vector<1x32x128xf32>,
    return
  }
  func.func @transform_0(%arg0: i32) -> (i32, i32, i32) {
    %c0_i32 = arith.constant 0 : i32
    %c0_i32_0 = arith.constant 0 : i32
    %c0_i32_1 = arith.constant 0 : i32
    return %arg0, %c0_i32, %c0_i32_0 : i32, i32, i32
  }
  func.func @transform_1(%arg0: i32) -> (i32, i32) {
    %c0_i32 = arith.constant 0 : i32
    %c0_i32_0 = arith.constant 0 : i32
    %c0_i32_1 = arith.constant 0 : i32
    return %c0_i32, %c0_i32_0 : i32, i32
  }
  func.func @transform_2(%arg0: i32) -> (i32, i32) {
    %c0_i32 = arith.constant 0 : i32
    %c0_i32_0 = arith.constant 0 : i32
    %c0_i32_1 = arith.constant 0 : i32
    return %c0_i32, %c0_i32_0 : i32, i32
  }
  func.func @transform_3(%arg0: i32) -> (i32, i32, i32) {
    %c0_i32 = arith.constant 0 : i32
    %c0_i32_0 = arith.constant 0 : i32
    %c0_i32_1 = arith.constant 0 : i32
    %c0_i32_2 = arith.constant 0 : i32
    return %c0_i32, %c0_i32_0, %c0_i32_1 : i32, i32, i32
  }
  func.func @transform_4(%arg0: i32) -> (i32, i32) {
    %c0_i32 = arith.constant 0 : i32
    %c0_i32_0 = arith.constant 0 : i32
    %c0_i32_1 = arith.constant 0 : i32
    return %c0_i32, %c0_i32_0 : i32, i32
  }
  func.func @transform_5(%arg0: i32) -> (i32, i32, i32) {
    %c0_i32 = arith.constant 0 : i32
    %c0_i32_0 = arith.constant 0 : i32
    %c0_i32_1 = arith.constant 0 : i32
    %c0_i32_2 = arith.constant 0 : i32
    return %c0_i32, %c0_i32_0, %c0_i32_1 : i32, i32, i32
  }
  func.func @transform_6(%arg0: i32) -> (i32, i32) {
    %c0_i32 = arith.constant 0 : i32
    %c0_i32_0 = arith.constant 0 : i32
    %c0_i32_1 = arith.constant 0 : i32
    return %c0_i32, %c0_i32_0 : i32, i32
  }
  func.func @transform_7(%arg0: i32) -> (i32, i32) {
    %c0_i32 = arith.constant 0 : i32
    %c0_i32_0 = arith.constant 0 : i32
    %c0_i32_1 = arith.constant 0 : i32
    return %c0_i32, %c0_i32_0 : i32, i32
  }
  func.func @transform_8(%arg0: i32) -> (i32, i32) {
    %c0_i32 = arith.constant 0 : i32
    %c0_i32_0 = arith.constant 0 : i32
    %c0_i32_1 = arith.constant 0 : i32
    return %c0_i32, %c0_i32_0 : i32, i32
  }
  func.func @transform_9(%arg0: i32) -> (i32, i32) {
    %c0_i32 = arith.constant 0 : i32
    %c0_i32_0 = arith.constant 0 : i32
    %c0_i32_1 = arith.constant 0 : i32
    return %c0_i32, %c0_i32_0 : i32, i32
  }
  func.func @transform_10(%arg0: i32) -> (i32, i32) {
    %c0_i32 = arith.constant 0 : i32
    %c0_i32_0 = arith.constant 0 : i32
    %c0_i32_1 = arith.constant 0 : i32
    return %c0_i32, %c0_i32_0 : i32, i32
  }
  func.func @transform_11(%arg0: i32) -> (i32, i32, i32) {
    %c0_i32 = arith.constant 0 : i32
    %c0_i32_0 = arith.constant 0 : i32
    %c0_i32_1 = arith.constant 0 : i32
    return %arg0, %c0_i32, %c0_i32_0 : i32, i32, i32
  }
}

</mosaic_0001>

<llo_original>
// kernel: tpu_custom_call.1
$region0: #{tpu_custom_call.1}
  #allocation0 [shape = 'u32[]', space=smem, size = 0x4, offset = 0x4, fixed_abs, tag = 'smem constant byte address 0x4 - core index']
  #allocation1 [shape = 'u32[72,128]{1,0:T(1,128)}', space=vmem, size = 0x9000, scoped, tag = 'internal scratch']
  %s0 = inlined_call_operand.hbm [shape: f32[2,64,128], index: 0, kind: input, shape index: {}]
  %s1 = inlined_call_operand.hbm [shape: f32[64,64], index: 1, kind: input, shape index: {}]
  %s2 = inlined_call_operand.hbm [shape: f32[64,64], index: 2, kind: input, shape index: {}]
  %s3 = inlined_call_operand.hbm [shape: f32[3,128,256], index: 3, kind: input, shape index: {}]
  %s4 = inlined_call_operand.vmem [shape: f32[1,256], index: 4, kind: input, shape index: {}]
  %s5 = inlined_call_operand.hbm [shape: f32[3,256,128], index: 5, kind: input, shape index: {}]
  %s6 = inlined_call_operand.hbm [shape: f32[32,64], index: 6, kind: input, shape index: {}]
  %s7 = inlined_call_operand.hbm [shape: f32[32,64], index: 7, kind: input, shape index: {}]
  %s8 = inlined_call_operand.hbm [shape: f32[32,64], index: 8, kind: input, shape index: {}]
  %s9 = inlined_call_operand.hbm [shape: f32[128,128], index: 9, kind: input, shape index: {}]
  %s10 = inlined_call_operand.vmem [shape: f32[1,128], index: 10, kind: input, shape index: {}]
  %s11 = inlined_call_operand.hbm [shape: f32[2,32,128], index: 11, kind: output, shape index: {}]
  %s12 = sld [smem:[#allocation0]]
  $region113: #{tpu_custom_call.1} parent=0
    _
  %s14 = ssub.s32 1, %s12
  %s15 = scalar_select 0, %s14, %s12
  $region1: #{tpu_custom_call.1} parent=0
    #allocation2 [shape = 'u8[65536]{0}', space=vmem, size = 0x10000, scoped, tag = 'input window, operand 0']
    #allocation3 [shape = 's32[2]{0}', space=sflag, size = 0x8, scoped, tag = 'scoped memory for tpu_custom_call.1']
    #allocation4 [shape = 's32[2]{0}', space=sflag, size = 0x8, scoped, tag = 'scoped memory for tpu_custom_call.1']
    #allocation5 [shape = 'u8[32768]{0}', space=vmem, size = 0x8000, scoped, tag = 'input window, operand 1, single buffered']
    #allocation6 [shape = 's32[1]{0}', space=sflag, size = 0x4, scoped, tag = 'scoped memory for tpu_custom_call.1']
    #allocation7 [shape = 'u8[32768]{0}', space=vmem, size = 0x8000, scoped, tag = 'input window, operand 2, single buffered']
    #allocation8 [shape = 'u8[393216]{0}', space=vmem, size = 0x60000, scoped, tag = 'input window, operand 3, single buffered']
    #allocation9 [shape = 's32[1]{0}', space=sflag, size = 0x4, scoped, tag = 'scoped memory for tpu_custom_call.1']
    #allocation10 [shape = 'u8[393216]{0}', space=vmem, size = 0x60000, scoped, tag = 'input window, operand 5, single buffered']
    #allocation11 [shape = 'u8[16384]{0}', space=vmem, size = 0x4000, scoped, tag = 'input window, operand 6, single buffered']
    #allocation12 [shape = 's32[1]{0}', space=sflag, size = 0x4, scoped, tag = 'scoped memory for tpu_custom_call.1']
    #allocation13 [shape = 'u8[16384]{0}', space=vmem, size = 0x4000, scoped, tag = 'input window, operand 7, single buffered']
    #allocation14 [shape = 'u8[16384]{0}', space=vmem, size = 0x4000, scoped, tag = 'input window, operand 8, single buffered']
    #allocation15 [shape = 's32[1]{0}', space=sflag, size = 0x4, scoped, tag = 'scoped memory for tpu_custom_call.1']
    #allocation16 [shape = 'u8[65536]{0}', space=vmem, size = 0x10000, scoped, tag = 'input window, operand 9, single buffered']
    #allocation17 [shape = 'u8[32768]{0}', space=vmem, size = 0x8000, scoped, tag = 'output window, operand 0']
    %16 = vsyncpa [#allocation3], 0
    %s17 = scalar_lea.sflag [#allocation3], 1
    %18 = vsyncpa %s17, 0
    %19 = vsyncpa [#allocation6], 0
    %20 = vsyncpa [#allocation9], 0
    %21 = vsyncpa [#allocation12], 0
    %22 = vsyncpa [#allocation15], 0
    %23 = vsyncpa [#allocation4], 0
    %s24 = scalar_lea.sflag [#allocation4], 1
    %25 = vsyncpa %s24, 0
    loop: start=0, step=1, limit=4
    $region2: #{tpu_custom_call.1} parent=1 // loop_pre_header
      _
    $region3: #{tpu_custom_call.1} parent=1 // loop_header
      %s27 = sphi 0, %s31
      %p28 = scmp.ge.s32.totalorder %s27, 4
      %s37 = sphi 0, %s39
      %s40 = sphi 0, %s37
      %s41 = sphi 0, %s40
      %s57 = sphi 0, %s41
      %s61 = sphi 0, %s61
      %s63 = sphi 0, %s61
      %s64 = sphi 0, %s63
      %s78 = sphi 0, %s64
      %s82 = sphi 0, %s82
      %s84 = sphi 0, %s82
      %s85 = sphi 0, %s84
      %s99 = sphi 0, %s85
      %s103 = sphi 0, %s103
      %s105 = sphi 0, %s103
      %s106 = sphi 0, %s105
      %s120 = sphi 0, %s106
      %s124 = sphi 0, %s124
      %s126 = sphi 0, %s124
      %s127 = sphi 0, %s126
      %s141 = sphi 0, %s127
      %s145 = sphi 0, %s145
      %s147 = sphi 0, %s145
      %s148 = sphi 0, %s147
      %s162 = sphi 0, %s148
      %s166 = sphi 0, %s166
      %s168 = sphi 0, %s166
      %s169 = sphi 0, %s168
      %s183 = sphi 0, %s169
      %s187 = sphi 0, %s187
      %s189 = sphi 0, %s187
      %s190 = sphi 0, %s189
      %s204 = sphi 0, %s190
      %s208 = sphi 0, %s208
      %s210 = sphi 0, %s208
      %s211 = sphi 0, %s210
      %s225 = sphi 0, %s211
      %s229 = sphi 0, %s229
      %s231 = sphi 0, %s229
      %s232 = sphi 0, %s231
      %s246 = sphi 0, %s232
      %s250 = sphi 0, %s250
      %s252 = sphi 0, %s250
      %s253 = sphi 0, %s252
      %s267 = sphi 0, %s253
      %s273 = sphi 0, %s275
      %s276 = sphi 0, %s273
      %s277 = sphi 0, %s276
      %s293 = sphi 0, %s277
    $region4: #{tpu_custom_call.1} parent=1 // loop_header_branch
      %30 = sbr.rel (%p28) target = $region8
    $region5: #{tpu_custom_call.1} parent=1 // loop_body
      %s32 = ssub.s32 %s27, 1
      %s33 = ssub.s32 %s27, 2
      %s34 = sadd.s32 %s27, 1
      %s35 = ssub.s32 %s27, %s34
      %p36 = scmp.eq.s32.totalorder %s35, 0
      %s38 = sadd.s32 %s37, 1
      %s39 = scalar_select %p36, %s37, %s38
      %p42 = pneg %p36
      %p43 = scmp.eq.s32.totalorder %s27, 1
      %p44 = por %p42, %p43
      %p45 = scmp.ne.s32.totalorder %s37, %s40
      %p46 = scmp.eq.s32.totalorder %s27, 0
      %p47 = por %p45, %p46
      %p48 = scmp.ne.s32.totalorder %s37, %s40
      %p49 = scmp.eq.s32.totalorder %s32, 1
      %p50 = por %p48, %p49
      %p51 = scmp.ne.s32.totalorder %s40, %s41
      %p52 = scmp.eq.s32.totalorder %s32, 0
      %p53 = por %p51, %p52
      %p54 = scmp.ne.s32.totalorder %s40, %s41
      %p55 = scmp.eq.s32.totalorder %s33, 1
      %p56 = por %p54, %p55
      %p58 = scmp.ne.s32.totalorder %s41, %s57
      %p59 = scmp.eq.s32.totalorder %s33, 0
      %p60 = por %p58, %p59
      %s62 = sadd.s32 %s61, 1
      %p65 = scmp.eq.s32.totalorder %s27, 1
      %p66 = scmp.ne.s32.totalorder %s61, %s63
      %p67 = scmp.eq.s32.totalorder %s27, 0
      %p68 = por %p66, %p67
      %p69 = scmp.ne.s32.totalorder %s61, %s63
      %p70 = scmp.eq.s32.totalorder %s32, 1
      %p71 = por %p69, %p70
      %p72 = scmp.ne.s32.totalorder %s63, %s64
      %p73 = scmp.eq.s32.totalorder %s32, 0
      %p74 = por %p72, %p73
      %p75 = scmp.ne.s32.totalorder %s63, %s64
      %p76 = scmp.eq.s32.totalorder %s33, 1
      %p77 = por %p75, %p76
      %p79 = scmp.ne.s32.totalorder %s64, %s78
      %p80 = scmp.eq.s32.totalorder %s33, 0
      %p81 = por %p79, %p80
      %s83 = sadd.s32 %s82, 1
      %p86 = scmp.eq.s32.totalorder %s27, 1
      %p87 = scmp.ne.s32.totalorder %s82, %s84
      %p88 = scmp.eq.s32.totalorder %s27, 0
      %p89 = por %p87, %p88
      %p90 = scmp.ne.s32.totalorder %s82, %s84
      %p91 = scmp.eq.s32.totalorder %s32, 1
      %p92 = por %p90, %p91
      %p93 = scmp.ne.s32.totalorder %s84, %s85
      %p94 = scmp.eq.s32.totalorder %s32, 0
      %p95 = por %p93, %p94
      %p96 = scmp.ne.s32.totalorder %s84, %s85
      %p97 = scmp.eq.s32.totalorder %s33, 1
      %p98 = por %p96, %p97
      %p100 = scmp.ne.s32.totalorder %s85, %s99
      %p101 = scmp.eq.s32.totalorder %s33, 0
      %p102 = por %p100, %p101
      %s104 = sadd.s32 %s103, 1
      %p107 = scmp.eq.s32.totalorder %s27, 1
      %p108 = scmp.ne.s32.totalorder %s103, %s105
      %p109 = scmp.eq.s32.totalorder %s27, 0
      %p110 = por %p108, %p109
      %p111 = scmp.ne.s32.totalorder %s103, %s105
      %p112 = scmp.eq.s32.totalorder %s32, 1
      %p113 = por %p111, %p112
      %p114 = scmp.ne.s32.totalorder %s105, %s106
      %p115 = scmp.eq.s32.totalorder %s32, 0
      %p116 = por %p114, %p115
      %p117 = scmp.ne.s32.totalorder %s105, %s106
      %p118 = scmp.eq.s32.totalorder %s33, 1
      %p119 = por %p117, %p118
      %p121 = scmp.ne.s32.totalorder %s106, %s120
      %p122 = scmp.eq.s32.totalorder %s33, 0
      %p123 = por %p121, %p122
      %s125 = sadd.s32 %s124, 1
      %p128 = scmp.eq.s32.totalorder %s27, 1
      %p129 = scmp.ne.s32.totalorder %s124, %s126
      %p130 = scmp.eq.s32.totalorder %s27, 0
      %p131 = por %p129, %p130
      %p132 = scmp.ne.s32.totalorder %s124, %s126
      %p133 = scmp.eq.s32.totalorder %s32, 1
      %p134 = por %p132, %p133
      %p135 = scmp.ne.s32.totalorder %s126, %s127
      %p136 = scmp.eq.s32.totalorder %s32, 0
      %p137 = por %p135, %p136
      %p138 = scmp.ne.s32.totalorder %s126, %s127
      %p139 = scmp.eq.s32.totalorder %s33, 1
      %p140 = por %p138, %p139
      %p142 = scmp.ne.s32.totalorder %s127, %s141
      %p143 = scmp.eq.s32.totalorder %s33, 0
      %p144 = por %p142, %p143
      %s146 = sadd.s32 %s145, 1
      %p149 = scmp.eq.s32.totalorder %s27, 1
      %p150 = scmp.ne.s32.totalorder %s145, %s147
      %p151 = scmp.eq.s32.totalorder %s27, 0
      %p152 = por %p150, %p151
      %p153 = scmp.ne.s32.totalorder %s145, %s147
      %p154 = scmp.eq.s32.totalorder %s32, 1
      %p155 = por %p153, %p154
      %p156 = scmp.ne.s32.totalorder %s147, %s148
      %p157 = scmp.eq.s32.totalorder %s32, 0
      %p158 = por %p156, %p157
      %p159 = scmp.ne.s32.totalorder %s147, %s148
      %p160 = scmp.eq.s32.totalorder %s33, 1
      %p161 = por %p159, %p160
      %p163 = scmp.ne.s32.totalorder %s148, %s162
      %p164 = scmp.eq.s32.totalorder %s33, 0
      %p165 = por %p163, %p164
      %s167 = sadd.s32 %s166, 1
      %p170 = scmp.eq.s32.totalorder %s27, 1
      %p171 = scmp.ne.s32.totalorder %s166, %s168
      %p172 = scmp.eq.s32.totalorder %s27, 0
      %p173 = por %p171, %p172
      %p174 = scmp.ne.s32.totalorder %s166, %s168
      %p175 = scmp.eq.s32.totalorder %s32, 1
      %p176 = por %p174, %p175
      %p177 = scmp.ne.s32.totalorder %s168, %s169
      %p178 = scmp.eq.s32.totalorder %s32, 0
      %p179 = por %p177, %p178
      %p180 = scmp.ne.s32.totalorder %s168, %s169
      %p181 = scmp.eq.s32.totalorder %s33, 1
      %p182 = por %p180, %p181
      %p184 = scmp.ne.s32.totalorder %s169, %s183
      %p185 = scmp.eq.s32.totalorder %s33, 0
      %p186 = por %p184, %p185
      %s188 = sadd.s32 %s187, 1
      %p191 = scmp.eq.s32.totalorder %s27, 1
      %p192 = scmp.ne.s32.totalorder %s187, %s189
      %p193 = scmp.eq.s32.totalorder %s27, 0
      %p194 = por %p192, %p193
      %p195 = scmp.ne.s32.totalorder %s187, %s189
      %p196 = scmp.eq.s32.totalorder %s32, 1
      %p197 = por %p195, %p196
      %p198 = scmp.ne.s32.totalorder %s189, %s190
      %p199 = scmp.eq.s32.totalorder %s32, 0
      %p200 = por %p198, %p199
      %p201 = scmp.ne.s32.totalorder %s189, %s190
      %p202 = scmp.eq.s32.totalorder %s33, 1
      %p203 = por %p201, %p202
      %p205 = scmp.ne.s32.totalorder %s190, %s204
      %p206 = scmp.eq.s32.totalorder %s33, 0
      %p207 = por %p205, %p206
      %s209 = sadd.s32 %s208, 1
      %p212 = scmp.eq.s32.totalorder %s27, 1
      %p213 = scmp.ne.s32.totalorder %s208, %s210
      %p214 = scmp.eq.s32.totalorder %s27, 0
      %p215 = por %p213, %p214
      %p216 = scmp.ne.s32.totalorder %s208, %s210
      %p217 = scmp.eq.s32.totalorder %s32, 1
      %p218 = por %p216, %p217
      %p219 = scmp.ne.s32.totalorder %s210, %s211
      %p220 = scmp.eq.s32.totalorder %s32, 0
      %p221 = por %p219, %p220
      %p222 = scmp.ne.s32.totalorder %s210, %s211
      %p223 = scmp.eq.s32.totalorder %s33, 1
      %p224 = por %p222, %p223
      %p226 = scmp.ne.s32.totalorder %s211, %s225
      %p227 = scmp.eq.s32.totalorder %s33, 0
      %p228 = por %p226, %p227
      %s230 = sadd.s32 %s229, 1
      %p233 = scmp.eq.s32.totalorder %s27, 1
      %p234 = scmp.ne.s32.totalorder %s229, %s231
      %p235 = scmp.eq.s32.totalorder %s27, 0
      %p236 = por %p234, %p235
      %p237 = scmp.ne.s32.totalorder %s229, %s231
      %p238 = scmp.eq.s32.totalorder %s32, 1
      %p239 = por %p237, %p238
      %p240 = scmp.ne.s32.totalorder %s231, %s232
      %p241 = scmp.eq.s32.totalorder %s32, 0
      %p242 = por %p240, %p241
      %p243 = scmp.ne.s32.totalorder %s231, %s232
      %p244 = scmp.eq.s32.totalorder %s33, 1
      %p245 = por %p243, %p244
      %p247 = scmp.ne.s32.totalorder %s232, %s246
      %p248 = scmp.eq.s32.totalorder %s33, 0
      %p249 = por %p247, %p248
      %s251 = sadd.s32 %s250, 1
      %p254 = scmp.eq.s32.totalorder %s27, 1
      %p255 = scmp.ne.s32.totalorder %s250, %s252
      %p256 = scmp.eq.s32.totalorder %s27, 0
      %p257 = por %p255, %p256
      %p258 = scmp.ne.s32.totalorder %s250, %s252
      %p259 = scmp.eq.s32.totalorder %s32, 1
      %p260 = por %p258, %p259
      %p261 = scmp.ne.s32.totalorder %s252, %s253
      %p262 = scmp.eq.s32.totalorder %s32, 0
      %p263 = por %p261, %p262
      %p264 = scmp.ne.s32.totalorder %s252, %s253
      %p265 = scmp.eq.s32.totalorder %s33, 1
      %p266 = por %p264, %p265
      %p268 = scmp.ne.s32.totalorder %s253, %s267
      %p269 = scmp.eq.s32.totalorder %s33, 0
      %p270 = por %p268, %p269
      %s271 = ssub.s32 %s27, %s34
      %p272 = scmp.eq.s32.totalorder %s271, 0
      %s274 = sadd.s32 %s273, 1
      %s275 = scalar_select %p272, %s273, %s274
      %p278 = pneg %p272
      %p279 = scmp.eq.s32.totalorder %s27, 1
      %p280 = por %p278, %p279
      %p281 = scmp.ne.s32.totalorder %s273, %s276
      %p282 = scmp.eq.s32.totalorder %s27, 0
      %p283 = por %p281, %p282
      %p284 = scmp.ne.s32.totalorder %s273, %s276
      %p285 = scmp.eq.s32.totalorder %s32, 1
      %p286 = por %p284, %p285
      %p287 = scmp.ne.s32.totalorder %s276, %s277
      %p288 = scmp.eq.s32.totalorder %s32, 0
      %p289 = por %p287, %p288
      %p290 = scmp.ne.s32.totalorder %s276, %s277
      %p291 = scmp.eq.s32.totalorder %s33, 1
      %p292 = por %p290, %p291
      %p294 = scmp.ne.s32.totalorder %s277, %s293
      %p295 = scmp.eq.s32.totalorder %s33, 0
      %p296 = por %p294, %p295
      %p297 = scmp.le.s32.totalorder 1, %s27
      %p298 = scmp.lt.s32.totalorder %s27, 3
      %p299 = pnand %p297, %p298
      %p300 = pneg %p299
      // Predicated region
      $region9: #{tpu_custom_call.1} parent=5 // pred_check
        _
      $region10: #{tpu_custom_call.1} parent=5 // pred_check_branch
        %302 = sbr.rel (%p299) target = $region12
      $region11: #{tpu_custom_call.1} parent=5 // pred_region
        %s303 = ssub.s32 %s27, 1
        // Predicated region
        $region13: #{tpu_custom_call.1} parent=11 // pred_check
          %p304 = pneg %p74
        $region14: #{tpu_custom_call.1} parent=11 // pred_check_branch
          %306 = sbr.rel (%p304) target = $region16
        $region15: #{tpu_custom_call.1} parent=11 // pred_region
          %308 = vsyncadd [#allocation6], 0
          %s309 = sshll.u32 %s1, 4
          %s310 = int_to_ptr.hbm [resolvable:$true] %s309
          %s311 = sshll.u32 [#allocation5], 4
          %s312 = int_to_ptr.vmem [resolvable:$true] %s311
          %317 = dma.hbm_to_vmem [thread:$0]  %s310, 1024, %s312, [#allocation6], 128, 128, 8
        $region16: #{tpu_custom_call.1} parent=11 // pred_fallthru
          _
        // Predicated region
        $region17: #{tpu_custom_call.1} parent=11 // pred_check
          %p318 = pneg %p95
        $region18: #{tpu_custom_call.1} parent=11 // pred_check_branch
          %320 = sbr.rel (%p318) target = $region20
        $region19: #{tpu_custom_call.1} parent=11 // pred_region
          %322 = vsyncadd [#allocation6], 0
          %s323 = sshll.u32 %s2, 4
          %s324 = int_to_ptr.hbm [resolvable:$true] %s323
          %s325 = sshll.u32 [#allocation7], 4
          %s326 = int_to_ptr.vmem [resolvable:$true] %s325
          %331 = dma.hbm_to_vmem [thread:$0]  %s324, 1024, %s326, [#allocation6], 128, 128, 8
        $region20: #{tpu_custom_call.1} parent=11 // pred_fallthru
          _
        // Predicated region
        $region21: #{tpu_custom_call.1} parent=11 // pred_check
          %p332 = pneg %p116
        $region22: #{tpu_custom_call.1} parent=11 // pred_check_branch
          %334 = sbr.rel (%p332) target = $region24
        $region23: #{tpu_custom_call.1} parent=11 // pred_region
          %336 = vsyncadd [#allocation9], 0
          %s337 = sshll.u32 %s3, 4
          %s338 = int_to_ptr.hbm [resolvable:$true] %s337
          %s339 = sshll.u32 [#allocation8], 4
          %s340 = int_to_ptr.vmem [resolvable:$true] %s339
          %345 = dma.hbm_to_vmem [thread:$0]  %s338, 12288, %s340, [#allocation9], 256, 256, 16
        $region24: #{tpu_custom_call.1} parent=11 // pred_fallthru
          _
        // Predicated region
        $region25: #{tpu_custom_call.1} parent=11 // pred_check
          %p346 = pneg %p137
        $region26: #{tpu_custom_call.1} parent=11 // pred_check_branch
          %348 = sbr.rel (%p346) target = $region28
        $region27: #{tpu_custom_call.1} parent=11 // pred_region
          _
        $region28: #{tpu_custom_call.1} parent=11 // pred_fallthru
          _
        // Predicated region
        $region29: #{tpu_custom_call.1} parent=11 // pred_check
          %p349 = pneg %p158
        $region30: #{tpu_custom_call.1} parent=11 // pred_check_branch
          %351 = sbr.rel (%p349) target = $region32
        $region31: #{tpu_custom_call.1} parent=11 // pred_region
          %353 = vsyncadd [#allocation9], 0
          %s354 = sshll.u32 %s5, 4
          %s355 = int_to_ptr.hbm [resolvable:$true] %s354
          %s356 = sshll.u32 [#allocation10], 4
          %s357 = int_to_ptr.vmem [resolvable:$true] %s356
          %362 = dma.hbm_to_vmem [thread:$0]  %s355, 12288, %s357, [#allocation9], 128, 128, 8
        $region32: #{tpu_custom_call.1} parent=11 // pred_fallthru
          _
        // Predicated region
        $region33: #{tpu_custom_call.1} parent=11 // pred_check
          %p363 = pneg %p179
        $region34: #{tpu_custom_call.1} parent=11 // pred_check_branch
          %365 = sbr.rel (%p363) target = $region36
        $region35: #{tpu_custom_call.1} parent=11 // pred_region
          %367 = vsyncadd [#allocation12], 0
          %s368 = sshll.u32 %s6, 4
          %s369 = int_to_ptr.hbm [resolvable:$true] %s368
          %s370 = sshll.u32 [#allocation11], 4
          %s371 = int_to_ptr.vmem [resolvable:$true] %s370
          %376 = dma.hbm_to_vmem [thread:$0]  %s369, 512, %s371, [#allocation12], 128, 128, 8
        $region36: #{tpu_custom_call.1} parent=11 // pred_fallthru
          _
        // Predicated region
        $region37: #{tpu_custom_call.1} parent=11 // pred_check
          %p377 = pneg %p200
        $region38: #{tpu_custom_call.1} parent=11 // pred_check_branch
          %379 = sbr.rel (%p377) target = $region40
        $region39: #{tpu_custom_call.1} parent=11 // pred_region
          %381 = vsyncadd [#allocation12], 0
          %s382 = sshll.u32 %s7, 4
          %s383 = int_to_ptr.hbm [resolvable:$true] %s382
          %s384 = sshll.u32 [#allocation13], 4
          %s385 = int_to_ptr.vmem [resolvable:$true] %s384
          %390 = dma.hbm_to_vmem [thread:$0]  %s383, 512, %s385, [#allocation12], 128, 128, 8
        $region40: #{tpu_custom_call.1} parent=11 // pred_fallthru
          _
        // Predicated region
        $region41: #{tpu_custom_call.1} parent=11 // pred_check
          %p391 = pneg %p221
        $region42: #{tpu_custom_call.1} parent=11 // pred_check_branch
          %393 = sbr.rel (%p391) target = $region44
        $region43: #{tpu_custom_call.1} parent=11 // pred_region
          %395 = vsyncadd [#allocation15], 0
          %s396 = sshll.u32 %s8, 4
          %s397 = int_to_ptr.hbm [resolvable:$true] %s396
          %s398 = sshll.u32 [#allocation14], 4
          %s399 = int_to_ptr.vmem [resolvable:$true] %s398
          %404 = dma.hbm_to_vmem [thread:$0]  %s397, 512, %s399, [#allocation15], 128, 128, 8
        $region44: #{tpu_custom_call.1} parent=11 // pred_fallthru
          _
        // Predicated region
        $region45: #{tpu_custom_call.1} parent=11 // pred_check
          %p405 = pneg %p242
        $region46: #{tpu_custom_call.1} parent=11 // pred_check_branch
          %407 = sbr.rel (%p405) target = $region48
        $region47: #{tpu_custom_call.1} parent=11 // pred_region
          %409 = vsyncadd [#allocation15], 0
          %s410 = sshll.u32 %s9, 4
          %s411 = int_to_ptr.hbm [resolvable:$true] %s410
          %s412 = sshll.u32 [#allocation16], 4
          %s413 = int_to_ptr.vmem [resolvable:$true] %s412
          %418 = dma.hbm_to_vmem [thread:$0]  %s411, 2048, %s413, [#allocation15], 128, 128, 8
        $region48: #{tpu_custom_call.1} parent=11 // pred_fallthru
          _
        // Predicated region
        $region49: #{tpu_custom_call.1} parent=11 // pred_check
          %p419 = pneg %p263
        $region50: #{tpu_custom_call.1} parent=11 // pred_check_branch
          %421 = sbr.rel (%p419) target = $region52
        $region51: #{tpu_custom_call.1} parent=11 // pred_region
          _
        $region52: #{tpu_custom_call.1} parent=11 // pred_fallthru
          _
      $region12: #{tpu_custom_call.1} parent=5 // pred_fallthru
        _
      %p422 = scmp.lt.s32.totalorder %s27, 2
      // Predicated region
      $region53: #{tpu_custom_call.1} parent=5 // pred_check
        %p423 = pneg %p422
      $region54: #{tpu_custom_call.1} parent=5 // pred_check_branch
        %425 = sbr.rel (%p423) target = $region56
      $region55: #{tpu_custom_call.1} parent=5 // pred_region
        // Predicated region
        $region57: #{tpu_custom_call.1} parent=55 // pred_check
          %p426 = pneg %p47
        $region58: #{tpu_custom_call.1} parent=55 // pred_check_branch
          %428 = sbr.rel (%p426) target = $region60
        $region59: #{tpu_custom_call.1} parent=55 // pred_region
          %s429 = sand.u32 %s37, 1
          %s430 = scalar_lea.sflag [#allocation3], %s429
          %s431 = sand.u32 %s37, 1
          %s432 = smul.addr %s431, 64
          %s433 = scalar_lea.vmem [#allocation2], %s432
          %435 = vsyncadd %s430, 0
          %s436 = smul.addr %s27, 8
          %s437 = smul.addr %s436, 8
          %s438 = scalar_lea.hbm %s0, %s437
          %s439 = sshll.u32 %s438, 4
          %s440 = int_to_ptr.hbm [resolvable:$true] %s439
          %s441 = sshll.u32 %s433, 4
          %s442 = int_to_ptr.vmem [resolvable:$true] %s441
          %447 = dma.hbm_to_vmem [thread:$0]  %s440, 1024, %s442, %s430, 128, 128, 8
        $region60: #{tpu_custom_call.1} parent=55 // pred_fallthru
          _
      $region56: #{tpu_custom_call.1} parent=5 // pred_fallthru
        _
      %p448 = scmp.le.s32.totalorder 1, %s27
      %p449 = scmp.lt.s32.totalorder %s27, 3
      %p450 = pnand %p448, %p449
      %p451 = pneg %p450
      // Predicated region
      $region61: #{tpu_custom_call.1} parent=5 // pred_check
        _
      $region62: #{tpu_custom_call.1} parent=5 // pred_check_branch
        %453 = sbr.rel (%p450) target = $region64
      $region63: #{tpu_custom_call.1} parent=5 // pred_region
        %s454 = ssub.s32 %s27, 1
        %s455 = sand.u32 %s40, 1
        %s456 = scalar_lea.sflag [#allocation3], %s455
        %s457 = sand.u32 %s40, 1
        %s458 = smul.addr %s457, 64
        %s459 = scalar_lea.vmem [#allocation2], %s458
        // Predicated region
        $region65: #{tpu_custom_call.1} parent=63 // pred_check
          %p460 = pneg %p53
        $region66: #{tpu_custom_call.1} parent=63 // pred_check_branch
          %462 = sbr.rel (%p460) target = $region68
        $region67: #{tpu_custom_call.1} parent=63 // pred_region
          %464 = dma.done %s456, 1024
        $region68: #{tpu_custom_call.1} parent=63 // pred_fallthru
          _
        // Predicated region
        $region69: #{tpu_custom_call.1} parent=63 // pred_check
          %p465 = pneg %p74
        $region70: #{tpu_custom_call.1} parent=63 // pred_check_branch
          %467 = sbr.rel (%p465) target = $region72
        $region71: #{tpu_custom_call.1} parent=63 // pred_region
          %469 = dma.done [#allocation6], 1024
        $region72: #{tpu_custom_call.1} parent=63 // pred_fallthru
          _
        // Predicated region
        $region73: #{tpu_custom_call.1} parent=63 // pred_check
          %p470 = pneg %p95
        $region74: #{tpu_custom_call.1} parent=63 // pred_check_branch
          %472 = sbr.rel (%p470) target = $region76
        $region75: #{tpu_custom_call.1} parent=63 // pred_region
          %474 = dma.done [#allocation6], 1024
        $region76: #{tpu_custom_call.1} parent=63 // pred_fallthru
          _
        // Predicated region
        $region77: #{tpu_custom_call.1} parent=63 // pred_check
          %p475 = pneg %p116
        $region78: #{tpu_custom_call.1} parent=63 // pred_check_branch
          %477 = sbr.rel (%p475) target = $region80
        $region79: #{tpu_custom_call.1} parent=63 // pred_region
          %479 = dma.done [#allocation9], 12288
        $region80: #{tpu_custom_call.1} parent=63 // pred_fallthru
          _
        // Predicated region
        $region81: #{tpu_custom_call.1} parent=63 // pred_check
          %p480 = pneg %p158
        $region82: #{tpu_custom_call.1} parent=63 // pred_check_branch
          %482 = sbr.rel (%p480) target = $region84
        $region83: #{tpu_custom_call.1} parent=63 // pred_region
          %484 = dma.done [#allocation9], 12288
        $region84: #{tpu_custom_call.1} parent=63 // pred_fallthru
          _
        // Predicated region
        $region85: #{tpu_custom_call.1} parent=63 // pred_check
          %p485 = pneg %p179
        $region86: #{tpu_custom_call.1} parent=63 // pred_check_branch
          %487 = sbr.rel (%p485) target = $region88
        $region87: #{tpu_custom_call.1} parent=63 // pred_region
          %489 = dma.done [#allocation12], 512
        $region88: #{tpu_custom_call.1} parent=63 // pred_fallthru
          _
        // Predicated region
        $region89: #{tpu_custom_call.1} parent=63 // pred_check
          %p490 = pneg %p200
        $region90: #{tpu_custom_call.1} parent=63 // pred_check_branch
          %492 = sbr.rel (%p490) target = $region92
        $region91: #{tpu_custom_call.1} parent=63 // pred_region
          %494 = dma.done [#allocation12], 512
        $region92: #{tpu_custom_call.1} parent=63 // pred_fallthru
          _
        // Predicated region
        $region93: #{tpu_custom_call.1} parent=63 // pred_check
          %p495 = pneg %p221
        $region94: #{tpu_custom_call.1} parent=63 // pred_check_branch
          %497 = sbr.rel (%p495) target = $region96
        $region95: #{tpu_custom_call.1} parent=63 // pred_region
          %499 = dma.done [#allocation15], 512
        $region96: #{tpu_custom_call.1} parent=63 // pred_fallthru
          _
        // Predicated region
        $region97: #{tpu_custom_call.1} parent=63 // pred_check
          %p500 = pneg %p242
        $region98: #{tpu_custom_call.1} parent=63 // pred_check_branch
          %502 = sbr.rel (%p500) target = $region100
        $region99: #{tpu_custom_call.1} parent=63 // pred_region
          %504 = dma.done [#allocation15], 2048
        $region100: #{tpu_custom_call.1} parent=63 // pred_fallthru
          _
        %s505 = sand.u32 %s40, 1
        %s506 = scalar_lea.sflag [#allocation3], %s505
        %s507 = sand.u32 %s40, 1
        %s508 = smul.addr %s507, 64
        %s509 = scalar_lea.vmem [#allocation2], %s508
        %p510 = pneg %p53
        %p511 = pneg %p50
        %p512 = pneg %p74
        %p513 = pneg %p71
        %p514 = pneg %p95
        %p515 = pneg %p92
        %p516 = pneg %p116
        %p517 = pneg %p113
        %p518 = pneg %p137
        %p519 = pneg %p134
        %p520 = pneg %p158
        %p521 = pneg %p155
        %p522 = pneg %p179
        %p523 = pneg %p176
        %p524 = pneg %p200
        %p525 = pneg %p197
        %p526 = pneg %p221
        %p527 = pneg %p218
        %p528 = pneg %p242
        %p529 = pneg %p239
        %p530 = pneg %p263
        %p531 = pneg %p260
        %p532 = pneg %p289
        %p533 = pneg %p286
        %s534 = sand.u32 %s276, 1
        %s535 = scalar_lea.sflag [#allocation4], %s534
        %s536 = sand.u32 %s276, 1
        %s537 = smul.addr %s536, 32
        %s538 = scalar_lea.vmem [#allocation17], %s537
        %v539 = vld [vmem:[%s459] sm:$0xff]
        %v540 = vld [vmem:[%s459 + $0x8] sm:$0xff]
        %v541 = vld [vmem:[%s459 + $0x10] sm:$0xff]
        %v542 = vld [vmem:[%s459 + $0x18] sm:$0xff]
        %v543 = vld [vmem:[%s459 + $0x20] sm:$0xff]
        %v544 = vld [vmem:[%s459 + $0x28] sm:$0xff]
        %v545 = vld [vmem:[%s459 + $0x30] sm:$0xff]
        %v546 = vld [vmem:[%s459 + $0x38] sm:$0xff]
        %v547 = vld [vmem:[#allocation5] sm:$0xff]
        %v548 = vld [vmem:[#allocation5 + $0x8] sm:$0xff]
        %v549 = vld [vmem:[#allocation5 + $0x10] sm:$0xff]
        %v550 = vld [vmem:[#allocation5 + $0x18] sm:$0xff]
        %v551 = vld [vmem:[#allocation5 + $0x20] sm:$0xff]
        %v552 = vld [vmem:[#allocation5 + $0x28] sm:$0xff]
        %v553 = vld [vmem:[#allocation5 + $0x30] sm:$0xff]
        %v554 = vld [vmem:[#allocation5 + $0x38] sm:$0xff]
        %vm555 = vcmask 523264
        %v557 = vsel %vm555, %v547, 0
        %v560 = vsel %vm555, %v548, 0
        %v563 = vsel %vm555, %v549, 0
        %v566 = vsel %vm555, %v550, 0
        %v569 = vsel %vm555, %v551, 0
        %v572 = vsel %vm555, %v552, 0
        %v575 = vsel %vm555, %v553, 0
        %v578 = vsel %vm555, %v554, 0
        %580 = vmatpush.msra.mxu0 0.0
        %581 = vmatpush.msra.mxu0 0.0
        %582 = vmatpush.msra.mxu0 0.0
        %583 = vmatpush.msra.mxu0 0.0
        %584 = vmatpush.msra.mxu0 0.0
        %585 = vmatpush.msra.mxu0 0.0
        %586 = vmatpush.msra.mxu0 0.0
        %587 = vmatpush.msra.mxu0 0.0
        %588 = vmatpush.msra.mxu0 %v546
        %589 = vmatpush.msra.mxu0 %v545
        %590 = vmatpush.msra.mxu0 %v544
        %591 = vmatpush.msra.mxu0 %v543
        %592 = vmatpush.msra.mxu0 %v542
        %593 = vmatpush.msra.mxu0 %v541
        %594 = vmatpush.msra.mxu0 %v540
        %595 = vmatpush.msra.mxu0 %v539
        %596 = vmatmul.f32.gmra.mxu0 %v557
        %v597 = vpop.f32.mrf.mxu0
        %v598 = vadd.f32 0.0, %v597
        %599 = vmatmul.f32.gmra.mxu0 %v560
        %v600 = vpop.f32.mrf.mxu0
        %v601 = vadd.f32 0.0, %v600
        %602 = vmatmul.f32.gmra.mxu0 %v563
        %v603 = vpop.f32.mrf.mxu0
        %v604 = vadd.f32 0.0, %v603
        %605 = vmatmul.f32.gmra.mxu0 %v566
        %v606 = vpop.f32.mrf.mxu0
        %v607 = vadd.f32 0.0, %v606
        %608 = vmatmul.f32.gmra.mxu0 %v569
        %v609 = vpop.f32.mrf.mxu0
        %v610 = vadd.f32 0.0, %v609
        %611 = vmatmul.f32.gmra.mxu0 %v572
        %v612 = vpop.f32.mrf.mxu0
        %v613 = vadd.f32 0.0, %v612
        %614 = vmatmul.f32.gmra.mxu0 %v575
        %v615 = vpop.f32.mrf.mxu0
        %v616 = vadd.f32 0.0, %v615
        %617 = vmatmul.f32.gmra.mxu0 %v578
        %v618 = vpop.f32.mrf.mxu0
        %v619 = vadd.f32 0.0, %v618
        %620 = vdwg.mxu0
        %v621 = vld [vmem:[#allocation7] sm:$0xff]
        %v622 = vld [vmem:[#allocation7 + $0x8] sm:$0xff]
        %v623 = vld [vmem:[#allocation7 + $0x10] sm:$0xff]
        %v624 = vld [vmem:[#allocation7 + $0x18] sm:$0xff]
        %v625 = vld [vmem:[#allocation7 + $0x20] sm:$0xff]
        %v626 = vld [vmem:[#allocation7 + $0x28] sm:$0xff]
        %v627 = vld [vmem:[#allocation7 + $0x30] sm:$0xff]
        %v628 = vld [vmem:[#allocation7 + $0x38] sm:$0xff]
        %v630 = vsel %vm555, %v621, 0
        %v633 = vsel %vm555, %v622, 0
        %v636 = vsel %vm555, %v623, 0
        %v639 = vsel %vm555, %v624, 0
        %v642 = vsel %vm555, %v625, 0
        %v645 = vsel %vm555, %v626, 0
        %v648 = vsel %vm555, %v627, 0
        %v651 = vsel %vm555, %v628, 0
        %653 = vmatpush.msra.mxu0 0.0
        %654 = vmatpush.msra.mxu0 0.0
        %655 = vmatpush.msra.mxu0 0.0
        %656 = vmatpush.msra.mxu0 0.0
        %657 = vmatpush.msra.mxu0 0.0
        %658 = vmatpush.msra.mxu0 0.0
        %659 = vmatpush.msra.mxu0 0.0
        %660 = vmatpush.msra.mxu0 0.0
        %661 = vmatpush.msra.mxu0 %v546
        %662 = vmatpush.msra.mxu0 %v545
        %663 = vmatpush.msra.mxu0 %v544
        %664 = vmatpush.msra.mxu0 %v543
        %665 = vmatpush.msra.mxu0 %v542
        %666 = vmatpush.msra.mxu0 %v541
        %667 = vmatpush.msra.mxu0 %v540
        %668 = vmatpush.msra.mxu0 %v539
        %669 = vmatmul.f32.gmra.mxu0 %v630
        %v670 = vpop.f32.mrf.mxu0
        %v671 = vadd.f32 0.0, %v670
        %672 = vmatmul.f32.gmra.mxu0 %v633
        %v673 = vpop.f32.mrf.mxu0
        %v674 = vadd.f32 0.0, %v673
        %675 = vmatmul.f32.gmra.mxu0 %v636
        %v676 = vpop.f32.mrf.mxu0
        %v677 = vadd.f32 0.0, %v676
        %678 = vmatmul.f32.gmra.mxu0 %v639
        %v679 = vpop.f32.mrf.mxu0
        %v680 = vadd.f32 0.0, %v679
        %681 = vmatmul.f32.gmra.mxu0 %v642
        %v682 = vpop.f32.mrf.mxu0
        %v683 = vadd.f32 0.0, %v682
        %684 = vmatmul.f32.gmra.mxu0 %v645
        %v685 = vpop.f32.mrf.mxu0
        %v686 = vadd.f32 0.0, %v685
        %687 = vmatmul.f32.gmra.mxu0 %v648
        %v688 = vpop.f32.mrf.mxu0
        %v689 = vadd.f32 0.0, %v688
        %690 = vmatmul.f32.gmra.mxu0 %v651
        %v691 = vpop.f32.mrf.mxu0
        %v692 = vadd.f32 0.0, %v691
        %693 = vdwg.mxu0
        %v694 = vld [vmem:[#allocation8] sm:$0xff]
        %v695 = vld [vmem:[#allocation8 + $0x8] sm:$0xff]
        %v696 = vld [vmem:[#allocation8 + $0x10] sm:$0xff]
        %v697 = vld [vmem:[#allocation8 + $0x18] sm:$0xff]
        %v698 = vld [vmem:[#allocation8 + $0x20] sm:$0xff]
        %v699 = vld [vmem:[#allocation8 + $0x28] sm:$0xff]
        %v700 = vld [vmem:[#allocation8 + $0x30] sm:$0xff]
        %v701 = vld [vmem:[#allocation8 + $0x38] sm:$0xff]
        %v702 = vld [vmem:[#allocation8 + $0x40] sm:$0xff]
        %v703 = vld [vmem:[#allocation8 + $0x48] sm:$0xff]
        %v704 = vld [vmem:[#allocation8 + $0x50] sm:$0xff]
        %v705 = vld [vmem:[#allocation8 + $0x58] sm:$0xff]
        %v706 = vld [vmem:[#allocation8 + $0x60] sm:$0xff]
        %v707 = vld [vmem:[#allocation8 + $0x68] sm:$0xff]
        %v708 = vld [vmem:[#allocation8 + $0x70] sm:$0xff]
        %v709 = vld [vmem:[#allocation8 + $0x78] sm:$0xff]
        %v710 = vld [vmem:[#allocation8 + $0x80] sm:$0xff]
        %v711 = vld [vmem:[#allocation8 + $0x88] sm:$0xff]
        %v712 = vld [vmem:[#allocation8 + $0x90] sm:$0xff]
        %v713 = vld [vmem:[#allocation8 + $0x98] sm:$0xff]
        %v714 = vld [vmem:[#allocation8 + $0xa0] sm:$0xff]
        %v715 = vld [vmem:[#allocation8 + $0xa8] sm:$0xff]
        %v716 = vld [vmem:[#allocation8 + $0xb0] sm:$0xff]
        %v717 = vld [vmem:[#allocation8 + $0xb8] sm:$0xff]
        %v718 = vld [vmem:[#allocation8 + $0xc0] sm:$0xff]
        %v719 = vld [vmem:[#allocation8 + $0xc8] sm:$0xff]
        %v720 = vld [vmem:[#allocation8 + $0xd0] sm:$0xff]
        %v721 = vld [vmem:[#allocation8 + $0xd8] sm:$0xff]
        %v722 = vld [vmem:[#allocation8 + $0xe0] sm:$0xff]
        %v723 = vld [vmem:[#allocation8 + $0xe8] sm:$0xff]
        %v724 = vld [vmem:[#allocation8 + $0xf0] sm:$0xff]
        %v725 = vld [vmem:[#allocation8 + $0xf8] sm:$0xff]
        %s726 = scalar_lea.vmem [#allocation8], 256
        %v727 = vld [vmem:[%s726] sm:$0xff]
        %v728 = vld [vmem:[%s726 + $0x8] sm:$0xff]
        %v729 = vld [vmem:[%s726 + $0x10] sm:$0xff]
        %v730 = vld [vmem:[%s726 + $0x18] sm:$0xff]
        %v731 = vld [vmem:[%s726 + $0x20] sm:$0xff]
        %v732 = vld [vmem:[%s726 + $0x28] sm:$0xff]
        %v733 = vld [vmem:[%s726 + $0x30] sm:$0xff]
        %v734 = vld [vmem:[%s726 + $0x38] sm:$0xff]
        %v735 = vld [vmem:[%s726 + $0x40] sm:$0xff]
        %v736 = vld [vmem:[%s726 + $0x48] sm:$0xff]
        %v737 = vld [vmem:[%s726 + $0x50] sm:$0xff]
        %v738 = vld [vmem:[%s726 + $0x58] sm:$0xff]
        %v739 = vld [vmem:[%s726 + $0x60] sm:$0xff]
        %v740 = vld [vmem:[%s726 + $0x68] sm:$0xff]
        %v741 = vld [vmem:[%s726 + $0x70] sm:$0xff]
        %v742 = vld [vmem:[%s726 + $0x78] sm:$0xff]
        %v743 = vld [vmem:[%s726 + $0x80] sm:$0xff]
        %v744 = vld [vmem:[%s726 + $0x88] sm:$0xff]
        %v745 = vld [vmem:[%s726 + $0x90] sm:$0xff]
        %v746 = vld [vmem:[%s726 + $0x98] sm:$0xff]
        %v747 = vld [vmem:[%s726 + $0xa0] sm:$0xff]
        %v748 = vld [vmem:[%s726 + $0xa8] sm:$0xff]
        %v749 = vld [vmem:[%s726 + $0xb0] sm:$0xff]
        %v750 = vld [vmem:[%s726 + $0xb8] sm:$0xff]
        %v751 = vld [vmem:[%s726 + $0xc0] sm:$0xff]
        %v752 = vld [vmem:[%s726 + $0xc8] sm:$0xff]
        %v753 = vld [vmem:[%s726 + $0xd0] sm:$0xff]
        %v754 = vld [vmem:[%s726 + $0xd8] sm:$0xff]
        %v755 = vld [vmem:[%s726 + $0xe0] sm:$0xff]
        %v756 = vld [vmem:[%s726 + $0xe8] sm:$0xff]
        %v757 = vld [vmem:[%s726 + $0xf0] sm:$0xff]
        %v758 = vld [vmem:[%s726 + $0xf8] sm:$0xff]
        %759 = vmatpush.msra.mxu0 %v757
        %760 = vmatpush.msra.mxu0 %v755
        %761 = vmatpush.msra.mxu0 %v753
        %762 = vmatpush.msra.mxu0 %v751
        %763 = vmatpush.msra.mxu0 %v749
        %764 = vmatpush.msra.mxu0 %v747
        %765 = vmatpush.msra.mxu0 %v745
        %766 = vmatpush.msra.mxu0 %v743
        %767 = vmatpush.msra.mxu0 %v741
        %768 = vmatpush.msra.mxu0 %v739
        %769 = vmatpush.msra.mxu0 %v737
        %770 = vmatpush.msra.mxu0 %v735
        %771 = vmatpush.msra.mxu0 %v733
        %772 = vmatpush.msra.mxu0 %v731
        %773 = vmatpush.msra.mxu0 %v729
        %774 = vmatpush.msra.mxu0 %v727
        %775 = vmatmul.f32.gmra.mxu0 %v539
        %v776 = vpop.f32.mrf.mxu0
        %v777 = vadd.f32 0.0, %v776
        %778 = vmatmul.f32.gmra.mxu0 %v540
        %v779 = vpop.f32.mrf.mxu0
        %v780 = vadd.f32 0.0, %v779
        %781 = vmatmul.f32.gmra.mxu0 %v541
        %v782 = vpop.f32.mrf.mxu0
        %v783 = vadd.f32 0.0, %v782
        %784 = vmatmul.f32.gmra.mxu0 %v542
        %v785 = vpop.f32.mrf.mxu0
        %v786 = vadd.f32 0.0, %v785
        %787 = vmatmul.f32.gmra.mxu0 %v543
        %v788 = vpop.f32.mrf.mxu0
        %v789 = vadd.f32 0.0, %v788
        %790 = vmatmul.f32.gmra.mxu0 %v544
        %v791 = vpop.f32.mrf.mxu0
        %v792 = vadd.f32 0.0, %v791
        %793 = vmatmul.f32.gmra.mxu0 %v545
        %v794 = vpop.f32.mrf.mxu0
        %v795 = vadd.f32 0.0, %v794
        %796 = vmatmul.f32.gmra.mxu0 %v546
        %v797 = vpop.f32.mrf.mxu0
        %v798 = vadd.f32 0.0, %v797
        %799 = vdwg.mxu0
        %800 = vmatpush.msra.mxu0 %v758
        %801 = vmatpush.msra.mxu0 %v756
        %802 = vmatpush.msra.mxu0 %v754
        %803 = vmatpush.msra.mxu0 %v752
        %804 = vmatpush.msra.mxu0 %v750
        %805 = vmatpush.msra.mxu0 %v748
        %806 = vmatpush.msra.mxu0 %v746
        %807 = vmatpush.msra.mxu0 %v744
        %808 = vmatpush.msra.mxu0 %v742
        %809 = vmatpush.msra.mxu0 %v740
        %810 = vmatpush.msra.mxu0 %v738
        %811 = vmatpush.msra.mxu0 %v736
        %812 = vmatpush.msra.mxu0 %v734
        %813 = vmatpush.msra.mxu0 %v732
        %814 = vmatpush.msra.mxu0 %v730
        %815 = vmatpush.msra.mxu0 %v728
        %816 = vmatmul.f32.gmra.mxu0 %v539
        %v817 = vpop.f32.mrf.mxu0
        %v818 = vadd.f32 0.0, %v817
        %819 = vmatmul.f32.gmra.mxu0 %v540
        %v820 = vpop.f32.mrf.mxu0
        %v821 = vadd.f32 0.0, %v820
        %822 = vmatmul.f32.gmra.mxu0 %v541
        %v823 = vpop.f32.mrf.mxu0
        %v824 = vadd.f32 0.0, %v823
        %825 = vmatmul.f32.gmra.mxu0 %v542
        %v826 = vpop.f32.mrf.mxu0
        %v827 = vadd.f32 0.0, %v826
        %828 = vmatmul.f32.gmra.mxu0 %v543
        %v829 = vpop.f32.mrf.mxu0
        %v830 = vadd.f32 0.0, %v829
        %831 = vmatmul.f32.gmra.mxu0 %v544
        %v832 = vpop.f32.mrf.mxu0
        %v833 = vadd.f32 0.0, %v832
        %834 = vmatmul.f32.gmra.mxu0 %v545
        %v835 = vpop.f32.mrf.mxu0
        %v836 = vadd.f32 0.0, %v835
        %837 = vmatmul.f32.gmra.mxu0 %v546
        %v838 = vpop.f32.mrf.mxu0
        %v839 = vadd.f32 0.0, %v838
        %840 = vdwg.mxu0
        %841 = vmatpush.msra.mxu0 %v724
        %842 = vmatpush.msra.mxu0 %v722
        %843 = vmatpush.msra.mxu0 %v720
        %844 = vmatpush.msra.mxu0 %v718
        %845 = vmatpush.msra.mxu0 %v716
        %846 = vmatpush.msra.mxu0 %v714
        %847 = vmatpush.msra.mxu0 %v712
        %848 = vmatpush.msra.mxu0 %v710
        %849 = vmatpush.msra.mxu0 %v708
        %850 = vmatpush.msra.mxu0 %v706
        %851 = vmatpush.msra.mxu0 %v704
        %852 = vmatpush.msra.mxu0 %v702
        %853 = vmatpush.msra.mxu0 %v700
        %854 = vmatpush.msra.mxu0 %v698
        %855 = vmatpush.msra.mxu0 %v696
        %856 = vmatpush.msra.mxu0 %v694
        %857 = vmatmul.f32.gmra.mxu0 %v598
        %v858 = vpop.f32.mrf.mxu0
        %v859 = vadd.f32 %v777, %v858
        %860 = vmatmul.f32.gmra.mxu0 %v601
        %v861 = vpop.f32.mrf.mxu0
        %v862 = vadd.f32 %v780, %v861
        %863 = vmatmul.f32.gmra.mxu0 %v604
        %v864 = vpop.f32.mrf.mxu0
        %v865 = vadd.f32 %v783, %v864
        %866 = vmatmul.f32.gmra.mxu0 %v607
        %v867 = vpop.f32.mrf.mxu0
        %v868 = vadd.f32 %v786, %v867
        %869 = vmatmul.f32.gmra.mxu0 %v610
        %v870 = vpop.f32.mrf.mxu0
        %v871 = vadd.f32 %v789, %v870
        %872 = vmatmul.f32.gmra.mxu0 %v613
        %v873 = vpop.f32.mrf.mxu0
        %v874 = vadd.f32 %v792, %v873
        %875 = vmatmul.f32.gmra.mxu0 %v616
        %v876 = vpop.f32.mrf.mxu0
        %v877 = vadd.f32 %v795, %v876
        %878 = vmatmul.f32.gmra.mxu0 %v619
        %v879 = vpop.f32.mrf.mxu0
        %v880 = vadd.f32 %v798, %v879
        %881 = vdwg.mxu0
        %882 = vmatpush.msra.mxu0 %v725
        %883 = vmatpush.msra.mxu0 %v723
        %884 = vmatpush.msra.mxu0 %v721
        %885 = vmatpush.msra.mxu0 %v719
        %886 = vmatpush.msra.mxu0 %v717
        %887 = vmatpush.msra.mxu0 %v715
        %888 = vmatpush.msra.mxu0 %v713
        %889 = vmatpush.msra.mxu0 %v711
        %890 = vmatpush.msra.mxu0 %v709
        %891 = vmatpush.msra.mxu0 %v707
        %892 = vmatpush.msra.mxu0 %v705
        %893 = vmatpush.msra.mxu0 %v703
        %894 = vmatpush.msra.mxu0 %v701
        %895 = vmatpush.msra.mxu0 %v699
        %896 = vmatpush.msra.mxu0 %v697
        %897 = vmatpush.msra.mxu0 %v695
        %898 = vmatmul.f32.gmra.mxu0 %v598
        %v899 = vpop.f32.mrf.mxu0
        %v900 = vadd.f32 %v818, %v899
        %901 = vmatmul.f32.gmra.mxu0 %v601
        %v902 = vpop.f32.mrf.mxu0
        %v903 = vadd.f32 %v821, %v902
        %904 = vmatmul.f32.gmra.mxu0 %v604
        %v905 = vpop.f32.mrf.mxu0
        %v906 = vadd.f32 %v824, %v905
        %907 = vmatmul.f32.gmra.mxu0 %v607
        %v908 = vpop.f32.mrf.mxu0
        %v909 = vadd.f32 %v827, %v908
        %910 = vmatmul.f32.gmra.mxu0 %v610
        %v911 = vpop.f32.mrf.mxu0
        %v912 = vadd.f32 %v830, %v911
        %913 = vmatmul.f32.gmra.mxu0 %v613
        %v914 = vpop.f32.mrf.mxu0
        %v915 = vadd.f32 %v833, %v914
        %916 = vmatmul.f32.gmra.mxu0 %v616
        %v917 = vpop.f32.mrf.mxu0
        %v918 = vadd.f32 %v836, %v917
        %919 = vmatmul.f32.gmra.mxu0 %v619
        %v920 = vpop.f32.mrf.mxu0
        %v921 = vadd.f32 %v839, %v920
        %922 = vdwg.mxu0
        %s923 = scalar_lea.vmem [#allocation8], 512
        %v924 = vld [vmem:[%s923] sm:$0xff]
        %v925 = vld [vmem:[%s923 + $0x8] sm:$0xff]
        %v926 = vld [vmem:[%s923 + $0x10] sm:$0xff]
        %v927 = vld [vmem:[%s923 + $0x18] sm:$0xff]
        %v928 = vld [vmem:[%s923 + $0x20] sm:$0xff]
        %v929 = vld [vmem:[%s923 + $0x28] sm:$0xff]
        %v930 = vld [vmem:[%s923 + $0x30] sm:$0xff]
        %v931 = vld [vmem:[%s923 + $0x38] sm:$0xff]
        %v932 = vld [vmem:[%s923 + $0x40] sm:$0xff]
        %v933 = vld [vmem:[%s923 + $0x48] sm:$0xff]
        %v934 = vld [vmem:[%s923 + $0x50] sm:$0xff]
        %v935 = vld [vmem:[%s923 + $0x58] sm:$0xff]
        %v936 = vld [vmem:[%s923 + $0x60] sm:$0xff]
        %v937 = vld [vmem:[%s923 + $0x68] sm:$0xff]
        %v938 = vld [vmem:[%s923 + $0x70] sm:$0xff]
        %v939 = vld [vmem:[%s923 + $0x78] sm:$0xff]
        %v940 = vld [vmem:[%s923 + $0x80] sm:$0xff]
        %v941 = vld [vmem:[%s923 + $0x88] sm:$0xff]
        %v942 = vld [vmem:[%s923 + $0x90] sm:$0xff]
        %v943 = vld [vmem:[%s923 + $0x98] sm:$0xff]
        %v944 = vld [vmem:[%s923 + $0xa0] sm:$0xff]
        %v945 = vld [vmem:[%s923 + $0xa8] sm:$0xff]
        %v946 = vld [vmem:[%s923 + $0xb0] sm:$0xff]
        %v947 = vld [vmem:[%s923 + $0xb8] sm:$0xff]
        %v948 = vld [vmem:[%s923 + $0xc0] sm:$0xff]
        %v949 = vld [vmem:[%s923 + $0xc8] sm:$0xff]
        %v950 = vld [vmem:[%s923 + $0xd0] sm:$0xff]
        %v951 = vld [vmem:[%s923 + $0xd8] sm:$0xff]
        %v952 = vld [vmem:[%s923 + $0xe0] sm:$0xff]
        %v953 = vld [vmem:[%s923 + $0xe8] sm:$0xff]
        %v954 = vld [vmem:[%s923 + $0xf0] sm:$0xff]
        %v955 = vld [vmem:[%s923 + $0xf8] sm:$0xff]
        %956 = vmatpush.msra.mxu0 %v954
        %957 = vmatpush.msra.mxu0 %v952
        %958 = vmatpush.msra.mxu0 %v950
        %959 = vmatpush.msra.mxu0 %v948
        %960 = vmatpush.msra.mxu0 %v946
        %961 = vmatpush.msra.mxu0 %v944
        %962 = vmatpush.msra.mxu0 %v942
        %963 = vmatpush.msra.mxu0 %v940
        %964 = vmatpush.msra.mxu0 %v938
        %965 = vmatpush.msra.mxu0 %v936
        %966 = vmatpush.msra.mxu0 %v934
        %967 = vmatpush.msra.mxu0 %v932
        %968 = vmatpush.msra.mxu0 %v930
        %969 = vmatpush.msra.mxu0 %v928
        %970 = vmatpush.msra.mxu0 %v926
        %971 = vmatpush.msra.mxu0 %v924
        %972 = vmatmul.f32.gmra.mxu0 %v671
        %v973 = vpop.f32.mrf.mxu0
        %v974 = vadd.f32 0.0, %v973
        %975 = vmatmul.f32.gmra.mxu0 %v674
        %v976 = vpop.f32.mrf.mxu0
        %v977 = vadd.f32 0.0, %v976
        %978 = vmatmul.f32.gmra.mxu0 %v677
        %v979 = vpop.f32.mrf.mxu0
        %v980 = vadd.f32 0.0, %v979
        %981 = vmatmul.f32.gmra.mxu0 %v680
        %v982 = vpop.f32.mrf.mxu0
        %v983 = vadd.f32 0.0, %v982
        %984 = vmatmul.f32.gmra.mxu0 %v683
        %v985 = vpop.f32.mrf.mxu0
        %v986 = vadd.f32 0.0, %v985
        %987 = vmatmul.f32.gmra.mxu0 %v686
        %v988 = vpop.f32.mrf.mxu0
        %v989 = vadd.f32 0.0, %v988
        %990 = vmatmul.f32.gmra.mxu0 %v689
        %v991 = vpop.f32.mrf.mxu0
        %v992 = vadd.f32 0.0, %v991
        %993 = vmatmul.f32.gmra.mxu0 %v692
        %v994 = vpop.f32.mrf.mxu0
        %v995 = vadd.f32 0.0, %v994
        %996 = vdwg.mxu0
        %997 = vmatpush.msra.mxu0 %v955
        %998 = vmatpush.msra.mxu0 %v953
        %999 = vmatpush.msra.mxu0 %v951
        %1000 = vmatpush.msra.mxu0 %v949
        %1001 = vmatpush.msra.mxu0 %v947
        %1002 = vmatpush.msra.mxu0 %v945
        %1003 = vmatpush.msra.mxu0 %v943
        %1004 = vmatpush.msra.mxu0 %v941
        %1005 = vmatpush.msra.mxu0 %v939
        %1006 = vmatpush.msra.mxu0 %v937
        %1007 = vmatpush.msra.mxu0 %v935
        %1008 = vmatpush.msra.mxu0 %v933
        %1009 = vmatpush.msra.mxu0 %v931
        %1010 = vmatpush.msra.mxu0 %v929
        %1011 = vmatpush.msra.mxu0 %v927
        %1012 = vmatpush.msra.mxu0 %v925
        %1013 = vmatmul.f32.gmra.mxu0 %v671
        %v1014 = vpop.f32.mrf.mxu0
        %v1015 = vadd.f32 0.0, %v1014
        %1016 = vmatmul.f32.gmra.mxu0 %v674
        %v1017 = vpop.f32.mrf.mxu0
        %v1018 = vadd.f32 0.0, %v1017
        %1019 = vmatmul.f32.gmra.mxu0 %v677
        %v1020 = vpop.f32.mrf.mxu0
        %v1021 = vadd.f32 0.0, %v1020
        %1022 = vmatmul.f32.gmra.mxu0 %v680
        %v1023 = vpop.f32.mrf.mxu0
        %v1024 = vadd.f32 0.0, %v1023
        %1025 = vmatmul.f32.gmra.mxu0 %v683
        %v1026 = vpop.f32.mrf.mxu0
        %v1027 = vadd.f32 0.0, %v1026
        %1028 = vmatmul.f32.gmra.mxu0 %v686
        %v1029 = vpop.f32.mrf.mxu0
        %v1030 = vadd.f32 0.0, %v1029
        %1031 = vmatmul.f32.gmra.mxu0 %v689
        %v1032 = vpop.f32.mrf.mxu0
        %v1033 = vadd.f32 0.0, %v1032
        %1034 = vmatmul.f32.gmra.mxu0 %v692
        %v1035 = vpop.f32.mrf.mxu0
        %v1036 = vadd.f32 0.0, %v1035
        %1037 = vdwg.mxu0
        %v1038 = vadd.f32 %v859, %v974
        %v1039 = vadd.f32 %v900, %v1015
        %v1040 = vadd.f32 %v862, %v977
        %v1041 = vadd.f32 %v903, %v1018
        %v1042 = vadd.f32 %v865, %v980
        %v1043 = vadd.f32 %v906, %v1021
        %v1044 = vadd.f32 %v868, %v983
        %v1045 = vadd.f32 %v909, %v1024
        %v1046 = vadd.f32 %v871, %v986
        %v1047 = vadd.f32 %v912, %v1027
        %v1048 = vadd.f32 %v874, %v989
        %v1049 = vadd.f32 %v915, %v1030
        %v1050 = vadd.f32 %v877, %v992
        %v1051 = vadd.f32 %v918, %v1033
        %v1052 = vadd.f32 %v880, %v995
        %v1053 = vadd.f32 %v921, %v1036
        %v1054 = vld [vmem:[%s4] sm:$0x3]
        %v1056 = vperm.slane %v1054, 0
        %v1057 = vperm.slane %v1054, 1
        %v1060 = vadd.f32 %v1038, %v1056
        %v1061 = vadd.f32 %v1039, %v1057
        %v1062 = vadd.f32 %v1040, %v1056
        %v1063 = vadd.f32 %v1041, %v1057
        %v1064 = vadd.f32 %v1042, %v1056
        %v1065 = vadd.f32 %v1043, %v1057
        %v1066 = vadd.f32 %v1044, %v1056
        %v1067 = vadd.f32 %v1045, %v1057
        %v1068 = vadd.f32 %v1046, %v1056
        %v1069 = vadd.f32 %v1047, %v1057
        %v1070 = vadd.f32 %v1048, %v1056
        %v1071 = vadd.f32 %v1049, %v1057
        %v1072 = vadd.f32 %v1050, %v1056
        %v1073 = vadd.f32 %v1051, %v1057
        %v1074 = vadd.f32 %v1052, %v1056
        %v1075 = vadd.f32 %v1053, %v1057
        %v1076 = vmax.f32 %v1060, 0.0
        %v1077 = vmax.f32 %v1061, 0.0
        %v1078 = vmax.f32 %v1062, 0.0
        %v1079 = vmax.f32 %v1063, 0.0
        %v1080 = vmax.f32 %v1064, 0.0
        %v1081 = vmax.f32 %v1065, 0.0
        %v1082 = vmax.f32 %v1066, 0.0
        %v1083 = vmax.f32 %v1067, 0.0
        %v1084 = vmax.f32 %v1068, 0.0
        %v1085 = vmax.f32 %v1069, 0.0
        %v1086 = vmax.f32 %v1070, 0.0
        %v1087 = vmax.f32 %v1071, 0.0
        %v1088 = vmax.f32 %v1072, 0.0
        %v1089 = vmax.f32 %v1073, 0.0
        %v1090 = vmax.f32 %v1074, 0.0
        %v1091 = vmax.f32 %v1075, 0.0
        %v1092 = vld [vmem:[#allocation10] sm:$0xff]
        %v1093 = vld [vmem:[#allocation10 + $0x8] sm:$0xff]
        %v1094 = vld [vmem:[#allocation10 + $0x10] sm:$0xff]
        %v1095 = vld [vmem:[#allocation10 + $0x18] sm:$0xff]
        %v1096 = vld [vmem:[#allocation10 + $0x20] sm:$0xff]
        %v1097 = vld [vmem:[#allocation10 + $0x28] sm:$0xff]
        %v1098 = vld [vmem:[#allocation10 + $0x30] sm:$0xff]
        %v1099 = vld [vmem:[#allocation10 + $0x38] sm:$0xff]
        %v1100 = vld [vmem:[#allocation10 + $0x40] sm:$0xff]
        %v1101 = vld [vmem:[#allocation10 + $0x48] sm:$0xff]
        %v1102 = vld [vmem:[#allocation10 + $0x50] sm:$0xff]
        %v1103 = vld [vmem:[#allocation10 + $0x58] sm:$0xff]
        %v1104 = vld [vmem:[#allocation10 + $0x60] sm:$0xff]
        %v1105 = vld [vmem:[#allocation10 + $0x68] sm:$0xff]
        %v1106 = vld [vmem:[#allocation10 + $0x70] sm:$0xff]
        %v1107 = vld [vmem:[#allocation10 + $0x78] sm:$0xff]
        %v1108 = vld [vmem:[#allocation10 + $0x80] sm:$0xff]
        %v1109 = vld [vmem:[#allocation10 + $0x88] sm:$0xff]
        %v1110 = vld [vmem:[#allocation10 + $0x90] sm:$0xff]
        %v1111 = vld [vmem:[#allocation10 + $0x98] sm:$0xff]
        %v1112 = vld [vmem:[#allocation10 + $0xa0] sm:$0xff]
        %v1113 = vld [vmem:[#allocation10 + $0xa8] sm:$0xff]
        %v1114 = vld [vmem:[#allocation10 + $0xb0] sm:$0xff]
        %v1115 = vld [vmem:[#allocation10 + $0xb8] sm:$0xff]
        %v1116 = vld [vmem:[#allocation10 + $0xc0] sm:$0xff]
        %v1117 = vld [vmem:[#allocation10 + $0xc8] sm:$0xff]
        %v1118 = vld [vmem:[#allocation10 + $0xd0] sm:$0xff]
        %v1119 = vld [vmem:[#allocation10 + $0xd8] sm:$0xff]
        %v1120 = vld [vmem:[#allocation10 + $0xe0] sm:$0xff]
        %v1121 = vld [vmem:[#allocation10 + $0xe8] sm:$0xff]
        %v1122 = vld [vmem:[#allocation10 + $0xf0] sm:$0xff]
        %v1123 = vld [vmem:[#allocation10 + $0xf8] sm:$0xff]
        %1124 = vmatpush.msra.mxu0 %v1107
        %1125 = vmatpush.msra.mxu0 %v1106
        %1126 = vmatpush.msra.mxu0 %v1105
        %1127 = vmatpush.msra.mxu0 %v1104
        %1128 = vmatpush.msra.mxu0 %v1103
        %1129 = vmatpush.msra.mxu0 %v1102
        %1130 = vmatpush.msra.mxu0 %v1101
        %1131 = vmatpush.msra.mxu0 %v1100
        %1132 = vmatpush.msra.mxu0 %v1099
        %1133 = vmatpush.msra.mxu0 %v1098
        %1134 = vmatpush.msra.mxu0 %v1097
        %1135 = vmatpush.msra.mxu0 %v1096
        %1136 = vmatpush.msra.mxu0 %v1095
        %1137 = vmatpush.msra.mxu0 %v1094
        %1138 = vmatpush.msra.mxu0 %v1093
        %1139 = vmatpush.msra.mxu0 %v1092
        %1140 = vmatmul.f32.gmra.mxu0 %v1076
        %v1141 = vpop.f32.mrf.mxu0
        %v1142 = vadd.f32 0.0, %v1141
        %1143 = vmatmul.f32.gmra.mxu0 %v1078
        %v1144 = vpop.f32.mrf.mxu0
        %v1145 = vadd.f32 0.0, %v1144
        %1146 = vmatmul.f32.gmra.mxu0 %v1080
        %v1147 = vpop.f32.mrf.mxu0
        %v1148 = vadd.f32 0.0, %v1147
        %1149 = vmatmul.f32.gmra.mxu0 %v1082
        %v1150 = vpop.f32.mrf.mxu0
        %v1151 = vadd.f32 0.0, %v1150
        %1152 = vmatmul.f32.gmra.mxu0 %v1084
        %v1153 = vpop.f32.mrf.mxu0
        %v1154 = vadd.f32 0.0, %v1153
        %1155 = vmatmul.f32.gmra.mxu0 %v1086
        %v1156 = vpop.f32.mrf.mxu0
        %v1157 = vadd.f32 0.0, %v1156
        %1158 = vmatmul.f32.gmra.mxu0 %v1088
        %v1159 = vpop.f32.mrf.mxu0
        %v1160 = vadd.f32 0.0, %v1159
        %1161 = vmatmul.f32.gmra.mxu0 %v1090
        %v1162 = vpop.f32.mrf.mxu0
        %v1163 = vadd.f32 0.0, %v1162
        %1164 = vdwg.mxu0
        %1165 = vmatpush.msra.mxu0 %v1123
        %1166 = vmatpush.msra.mxu0 %v1122
        %1167 = vmatpush.msra.mxu0 %v1121
        %1168 = vmatpush.msra.mxu0 %v1120
        %1169 = vmatpush.msra.mxu0 %v1119
        %1170 = vmatpush.msra.mxu0 %v1118
        %1171 = vmatpush.msra.mxu0 %v1117
        %1172 = vmatpush.msra.mxu0 %v1116
        %1173 = vmatpush.msra.mxu0 %v1115
        %1174 = vmatpush.msra.mxu0 %v1114
        %1175 = vmatpush.msra.mxu0 %v1113
        %1176 = vmatpush.msra.mxu0 %v1112
        %1177 = vmatpush.msra.mxu0 %v1111
        %1178 = vmatpush.msra.mxu0 %v1110
        %1179 = vmatpush.msra.mxu0 %v1109
        %1180 = vmatpush.msra.mxu0 %v1108
        %1181 = vmatmul.f32.gmra.mxu0 %v1077
        %v1182 = vpop.f32.mrf.mxu0
        %v1183 = vadd.f32 %v1142, %v1182
        %1184 = vmatmul.f32.gmra.mxu0 %v1079
        %v1185 = vpop.f32.mrf.mxu0
        %v1186 = vadd.f32 %v1145, %v1185
        %1187 = vmatmul.f32.gmra.mxu0 %v1081
        %v1188 = vpop.f32.mrf.mxu0
        %v1189 = vadd.f32 %v1148, %v1188
        %1190 = vmatmul.f32.gmra.mxu0 %v1083
        %v1191 = vpop.f32.mrf.mxu0
        %v1192 = vadd.f32 %v1151, %v1191
        %1193 = vmatmul.f32.gmra.mxu0 %v1085
        %v1194 = vpop.f32.mrf.mxu0
        %v1195 = vadd.f32 %v1154, %v1194
        %1196 = vmatmul.f32.gmra.mxu0 %v1087
        %v1197 = vpop.f32.mrf.mxu0
        %v1198 = vadd.f32 %v1157, %v1197
        %1199 = vmatmul.f32.gmra.mxu0 %v1089
        %v1200 = vpop.f32.mrf.mxu0
        %v1201 = vadd.f32 %v1160, %v1200
        %1202 = vmatmul.f32.gmra.mxu0 %v1091
        %v1203 = vpop.f32.mrf.mxu0
        %v1204 = vadd.f32 %v1163, %v1203
        %1205 = vdwg.mxu0
        %s1206 = scalar_lea.vmem [#allocation10], 256
        %v1207 = vld [vmem:[%s1206] sm:$0xff]
        %v1208 = vld [vmem:[%s1206 + $0x8] sm:$0xff]
        %v1209 = vld [vmem:[%s1206 + $0x10] sm:$0xff]
        %v1210 = vld [vmem:[%s1206 + $0x18] sm:$0xff]
        %v1211 = vld [vmem:[%s1206 + $0x20] sm:$0xff]
        %v1212 = vld [vmem:[%s1206 + $0x28] sm:$0xff]
        %v1213 = vld [vmem:[%s1206 + $0x30] sm:$0xff]
        %v1214 = vld [vmem:[%s1206 + $0x38] sm:$0xff]
        %v1215 = vld [vmem:[%s1206 + $0x40] sm:$0xff]
        %v1216 = vld [vmem:[%s1206 + $0x48] sm:$0xff]
        %v1217 = vld [vmem:[%s1206 + $0x50] sm:$0xff]
        %v1218 = vld [vmem:[%s1206 + $0x58] sm:$0xff]
        %v1219 = vld [vmem:[%s1206 + $0x60] sm:$0xff]
        %v1220 = vld [vmem:[%s1206 + $0x68] sm:$0xff]
        %v1221 = vld [vmem:[%s1206 + $0x70] sm:$0xff]
        %v1222 = vld [vmem:[%s1206 + $0x78] sm:$0xff]
        %v1223 = vld [vmem:[%s1206 + $0x80] sm:$0xff]
        %v1224 = vld [vmem:[%s1206 + $0x88] sm:$0xff]
        %v1225 = vld [vmem:[%s1206 + $0x90] sm:$0xff]
        %v1226 = vld [vmem:[%s1206 + $0x98] sm:$0xff]
        %v1227 = vld [vmem:[%s1206 + $0xa0] sm:$0xff]
        %v1228 = vld [vmem:[%s1206 + $0xa8] sm:$0xff]
        %v1229 = vld [vmem:[%s1206 + $0xb0] sm:$0xff]
        %v1230 = vld [vmem:[%s1206 + $0xb8] sm:$0xff]
        %v1231 = vld [vmem:[%s1206 + $0xc0] sm:$0xff]
        %v1232 = vld [vmem:[%s1206 + $0xc8] sm:$0xff]
        %v1233 = vld [vmem:[%s1206 + $0xd0] sm:$0xff]
        %v1234 = vld [vmem:[%s1206 + $0xd8] sm:$0xff]
        %v1235 = vld [vmem:[%s1206 + $0xe0] sm:$0xff]
        %v1236 = vld [vmem:[%s1206 + $0xe8] sm:$0xff]
        %v1237 = vld [vmem:[%s1206 + $0xf0] sm:$0xff]
        %v1238 = vld [vmem:[%s1206 + $0xf8] sm:$0xff]
        %1239 = vmatpush.msra.mxu0 %v1222
        %1240 = vmatpush.msra.mxu0 %v1221
        %1241 = vmatpush.msra.mxu0 %v1220
        %1242 = vmatpush.msra.mxu0 %v1219
        %1243 = vmatpush.msra.mxu0 %v1218
        %1244 = vmatpush.msra.mxu0 %v1217
        %1245 = vmatpush.msra.mxu0 %v1216
        %1246 = vmatpush.msra.mxu0 %v1215
        %1247 = vmatpush.msra.mxu0 %v1214
        %1248 = vmatpush.msra.mxu0 %v1213
        %1249 = vmatpush.msra.mxu0 %v1212
        %1250 = vmatpush.msra.mxu0 %v1211
        %1251 = vmatpush.msra.mxu0 %v1210
        %1252 = vmatpush.msra.mxu0 %v1209
        %1253 = vmatpush.msra.mxu0 %v1208
        %1254 = vmatpush.msra.mxu0 %v1207
        %1255 = vmatmul.f32.gmra.mxu0 %v1076
        %v1256 = vpop.f32.mrf.mxu0
        %v1257 = vadd.f32 0.0, %v1256
        %1258 = vmatmul.f32.gmra.mxu0 %v1078
        %v1259 = vpop.f32.mrf.mxu0
        %v1260 = vadd.f32 0.0, %v1259
        %1261 = vmatmul.f32.gmra.mxu0 %v1080
        %v1262 = vpop.f32.mrf.mxu0
        %v1263 = vadd.f32 0.0, %v1262
        %1264 = vmatmul.f32.gmra.mxu0 %v1082
        %v1265 = vpop.f32.mrf.mxu0
        %v1266 = vadd.f32 0.0, %v1265
        %1267 = vmatmul.f32.gmra.mxu0 %v1084
        %v1268 = vpop.f32.mrf.mxu0
        %v1269 = vadd.f32 0.0, %v1268
        %1270 = vmatmul.f32.gmra.mxu0 %v1086
        %v1271 = vpop.f32.mrf.mxu0
        %v1272 = vadd.f32 0.0, %v1271
        %1273 = vmatmul.f32.gmra.mxu0 %v1088
        %v1274 = vpop.f32.mrf.mxu0
        %v1275 = vadd.f32 0.0, %v1274
        %1276 = vmatmul.f32.gmra.mxu0 %v1090
        %v1277 = vpop.f32.mrf.mxu0
        %v1278 = vadd.f32 0.0, %v1277
        %1279 = vdwg.mxu0
        %1280 = vmatpush.msra.mxu0 %v1238
        %1281 = vmatpush.msra.mxu0 %v1237
        %1282 = vmatpush.msra.mxu0 %v1236
        %1283 = vmatpush.msra.mxu0 %v1235
        %1284 = vmatpush.msra.mxu0 %v1234
        %1285 = vmatpush.msra.mxu0 %v1233
        %1286 = vmatpush.msra.mxu0 %v1232
        %1287 = vmatpush.msra.mxu0 %v1231
        %1288 = vmatpush.msra.mxu0 %v1230
        %1289 = vmatpush.msra.mxu0 %v1229
        %1290 = vmatpush.msra.mxu0 %v1228
        %1291 = vmatpush.msra.mxu0 %v1227
        %1292 = vmatpush.msra.mxu0 %v1226
        %1293 = vmatpush.msra.mxu0 %v1225
        %1294 = vmatpush.msra.mxu0 %v1224
        %1295 = vmatpush.msra.mxu0 %v1223
        %1296 = vmatmul.f32.gmra.mxu0 %v1077
        %v1297 = vpop.f32.mrf.mxu0
        %v1298 = vadd.f32 %v1257, %v1297
        %1299 = vmatmul.f32.gmra.mxu0 %v1079
        %v1300 = vpop.f32.mrf.mxu0
        %v1301 = vadd.f32 %v1260, %v1300
        %1302 = vmatmul.f32.gmra.mxu0 %v1081
        %v1303 = vpop.f32.mrf.mxu0
        %v1304 = vadd.f32 %v1263, %v1303
        %1305 = vmatmul.f32.gmra.mxu0 %v1083
        %v1306 = vpop.f32.mrf.mxu0
        %v1307 = vadd.f32 %v1266, %v1306
        %1308 = vmatmul.f32.gmra.mxu0 %v1085
        %v1309 = vpop.f32.mrf.mxu0
        %v1310 = vadd.f32 %v1269, %v1309
        %1311 = vmatmul.f32.gmra.mxu0 %v1087
        %v1312 = vpop.f32.mrf.mxu0
        %v1313 = vadd.f32 %v1272, %v1312
        %1314 = vmatmul.f32.gmra.mxu0 %v1089
        %v1315 = vpop.f32.mrf.mxu0
        %v1316 = vadd.f32 %v1275, %v1315
        %1317 = vmatmul.f32.gmra.mxu0 %v1091
        %v1318 = vpop.f32.mrf.mxu0
        %v1319 = vadd.f32 %v1278, %v1318
        %1320 = vdwg.mxu0
        %s1321 = scalar_lea.vmem [#allocation10], 512
        %v1322 = vld [vmem:[%s1321] sm:$0xff]
        %v1323 = vld [vmem:[%s1321 + $0x8] sm:$0xff]
        %v1324 = vld [vmem:[%s1321 + $0x10] sm:$0xff]
        %v1325 = vld [vmem:[%s1321 + $0x18] sm:$0xff]
        %v1326 = vld [vmem:[%s1321 + $0x20] sm:$0xff]
        %v1327 = vld [vmem:[%s1321 + $0x28] sm:$0xff]
        %v1328 = vld [vmem:[%s1321 + $0x30] sm:$0xff]
        %v1329 = vld [vmem:[%s1321 + $0x38] sm:$0xff]
        %v1330 = vld [vmem:[%s1321 + $0x40] sm:$0xff]
        %v1331 = vld [vmem:[%s1321 + $0x48] sm:$0xff]
        %v1332 = vld [vmem:[%s1321 + $0x50] sm:$0xff]
        %v1333 = vld [vmem:[%s1321 + $0x58] sm:$0xff]
        %v1334 = vld [vmem:[%s1321 + $0x60] sm:$0xff]
        %v1335 = vld [vmem:[%s1321 + $0x68] sm:$0xff]
        %v1336 = vld [vmem:[%s1321 + $0x70] sm:$0xff]
        %v1337 = vld [vmem:[%s1321 + $0x78] sm:$0xff]
        %v1338 = vld [vmem:[%s1321 + $0x80] sm:$0xff]
        %v1339 = vld [vmem:[%s1321 + $0x88] sm:$0xff]
        %v1340 = vld [vmem:[%s1321 + $0x90] sm:$0xff]
        %v1341 = vld [vmem:[%s1321 + $0x98] sm:$0xff]
        %v1342 = vld [vmem:[%s1321 + $0xa0] sm:$0xff]
        %v1343 = vld [vmem:[%s1321 + $0xa8] sm:$0xff]
        %v1344 = vld [vmem:[%s1321 + $0xb0] sm:$0xff]
        %v1345 = vld [vmem:[%s1321 + $0xb8] sm:$0xff]
        %v1346 = vld [vmem:[%s1321 + $0xc0] sm:$0xff]
        %v1347 = vld [vmem:[%s1321 + $0xc8] sm:$0xff]
        %v1348 = vld [vmem:[%s1321 + $0xd0] sm:$0xff]
        %v1349 = vld [vmem:[%s1321 + $0xd8] sm:$0xff]
        %v1350 = vld [vmem:[%s1321 + $0xe0] sm:$0xff]
        %v1351 = vld [vmem:[%s1321 + $0xe8] sm:$0xff]
        %v1352 = vld [vmem:[%s1321 + $0xf0] sm:$0xff]
        %v1353 = vld [vmem:[%s1321 + $0xf8] sm:$0xff]
        %1354 = vmatpush.msra.mxu0 %v1337
        %1355 = vmatpush.msra.mxu0 %v1336
        %1356 = vmatpush.msra.mxu0 %v1335
        %1357 = vmatpush.msra.mxu0 %v1334
        %1358 = vmatpush.msra.mxu0 %v1333
        %1359 = vmatpush.msra.mxu0 %v1332
        %1360 = vmatpush.msra.mxu0 %v1331
        %1361 = vmatpush.msra.mxu0 %v1330
        %1362 = vmatpush.msra.mxu0 %v1329
        %1363 = vmatpush.msra.mxu0 %v1328
        %1364 = vmatpush.msra.mxu0 %v1327
        %1365 = vmatpush.msra.mxu0 %v1326
        %1366 = vmatpush.msra.mxu0 %v1325
        %1367 = vmatpush.msra.mxu0 %v1324
        %1368 = vmatpush.msra.mxu0 %v1323
        %1369 = vmatpush.msra.mxu0 %v1322
        %1370 = vmatmul.f32.gmra.mxu0 %v1076
        %v1371 = vpop.f32.mrf.mxu0
        %v1372 = vadd.f32 0.0, %v1371
        %1373 = vmatmul.f32.gmra.mxu0 %v1078
        %v1374 = vpop.f32.mrf.mxu0
        %v1375 = vadd.f32 0.0, %v1374
        %1376 = vmatmul.f32.gmra.mxu0 %v1080
        %v1377 = vpop.f32.mrf.mxu0
        %v1378 = vadd.f32 0.0, %v1377
        %1379 = vmatmul.f32.gmra.mxu0 %v1082
        %v1380 = vpop.f32.mrf.mxu0
        %v1381 = vadd.f32 0.0, %v1380
        %1382 = vmatmul.f32.gmra.mxu0 %v1084
        %v1383 = vpop.f32.mrf.mxu0
        %v1384 = vadd.f32 0.0, %v1383
        %1385 = vmatmul.f32.gmra.mxu0 %v1086
        %v1386 = vpop.f32.mrf.mxu0
        %v1387 = vadd.f32 0.0, %v1386
        %1388 = vmatmul.f32.gmra.mxu0 %v1088
        %v1389 = vpop.f32.mrf.mxu0
        %v1390 = vadd.f32 0.0, %v1389
        %1391 = vmatmul.f32.gmra.mxu0 %v1090
        %v1392 = vpop.f32.mrf.mxu0
        %v1393 = vadd.f32 0.0, %v1392
        %1394 = vdwg.mxu0
        %1395 = vmatpush.msra.mxu0 %v1353
        %1396 = vmatpush.msra.mxu0 %v1352
        %1397 = vmatpush.msra.mxu0 %v1351
        %1398 = vmatpush.msra.mxu0 %v1350
        %1399 = vmatpush.msra.mxu0 %v1349
        %1400 = vmatpush.msra.mxu0 %v1348
        %1401 = vmatpush.msra.mxu0 %v1347
        %1402 = vmatpush.msra.mxu0 %v1346
        %1403 = vmatpush.msra.mxu0 %v1345
        %1404 = vmatpush.msra.mxu0 %v1344
        %1405 = vmatpush.msra.mxu0 %v1343
        %1406 = vmatpush.msra.mxu0 %v1342
        %1407 = vmatpush.msra.mxu0 %v1341
        %1408 = vmatpush.msra.mxu0 %v1340
        %1409 = vmatpush.msra.mxu0 %v1339
        %1410 = vmatpush.msra.mxu0 %v1338
        %1411 = vmatmul.f32.gmra.mxu0 %v1077
        %v1412 = vpop.f32.mrf.mxu0
        %v1413 = vadd.f32 %v1372, %v1412
        %1414 = vmatmul.f32.gmra.mxu0 %v1079
        %v1415 = vpop.f32.mrf.mxu0
        %v1416 = vadd.f32 %v1375, %v1415
        %1417 = vmatmul.f32.gmra.mxu0 %v1081
        %v1418 = vpop.f32.mrf.mxu0
        %v1419 = vadd.f32 %v1378, %v1418
        %1420 = vmatmul.f32.gmra.mxu0 %v1083
        %v1421 = vpop.f32.mrf.mxu0
        %v1422 = vadd.f32 %v1381, %v1421
        %1423 = vmatmul.f32.gmra.mxu0 %v1085
        %v1424 = vpop.f32.mrf.mxu0
        %v1425 = vadd.f32 %v1384, %v1424
        %1426 = vmatmul.f32.gmra.mxu0 %v1087
        %v1427 = vpop.f32.mrf.mxu0
        %v1428 = vadd.f32 %v1387, %v1427
        %1429 = vmatmul.f32.gmra.mxu0 %v1089
        %v1430 = vpop.f32.mrf.mxu0
        %v1431 = vadd.f32 %v1390, %v1430
        %1432 = vmatmul.f32.gmra.mxu0 %v1091
        %v1433 = vpop.f32.mrf.mxu0
        %v1434 = vadd.f32 %v1393, %v1433
        %1435 = vdwg.mxu0
        %v1436 = vld [vmem:[#allocation11] sm:$0xff]
        %v1437 = vld [vmem:[#allocation11 + $0x8] sm:$0xff]
        %v1438 = vld [vmem:[#allocation11 + $0x10] sm:$0xff]
        %v1439 = vld [vmem:[#allocation11 + $0x18] sm:$0xff]
        %v1440 = vld [vmem:[#allocation13] sm:$0xff]
        %v1441 = vld [vmem:[#allocation13 + $0x8] sm:$0xff]
        %v1442 = vld [vmem:[#allocation13 + $0x10] sm:$0xff]
        %v1443 = vld [vmem:[#allocation13 + $0x18] sm:$0xff]
        %v1445 = vsel %vm555, %v1440, 0
        %v1448 = vsel %vm555, %v1441, 0
        %v1451 = vsel %vm555, %v1442, 0
        %v1454 = vsel %vm555, %v1443, 0
        %1456 = vmatpush.msra.mxu0 0.0
        %1457 = vmatpush.msra.mxu0 0.0
        %1458 = vmatpush.msra.mxu0 0.0
        %1459 = vmatpush.msra.mxu0 0.0
        %1460 = vmatpush.msra.mxu0 0.0
        %1461 = vmatpush.msra.mxu0 0.0
        %1462 = vmatpush.msra.mxu0 0.0
        %1463 = vmatpush.msra.mxu0 0.0
        %1464 = vmatpush.msra.mxu0 %v1319
        %1465 = vmatpush.msra.mxu0 %v1316
        %1466 = vmatpush.msra.mxu0 %v1313
        %1467 = vmatpush.msra.mxu0 %v1310
        %1468 = vmatpush.msra.mxu0 %v1307
        %1469 = vmatpush.msra.mxu0 %v1304
        %1470 = vmatpush.msra.mxu0 %v1301
        %1471 = vmatpush.msra.mxu0 %v1298
        %1472 = vmatmul.f32.gmra.mxu0 %v1445
        %v1473 = vpop.f32.mrf.mxu0
        %v1474 = vadd.f32 0.0, %v1473
        %1475 = vmatmul.f32.gmra.mxu0 %v1448
        %v1476 = vpop.f32.mrf.mxu0
        %v1477 = vadd.f32 0.0, %v1476
        %1478 = vmatmul.f32.gmra.mxu0 %v1451
        %v1479 = vpop.f32.mrf.mxu0
        %v1480 = vadd.f32 0.0, %v1479
        %1481 = vmatmul.f32.gmra.mxu0 %v1454
        %v1482 = vpop.f32.mrf.mxu0
        %v1483 = vadd.f32 0.0, %v1482
        %1484 = vdwg.mxu0
        %v1486 = vsel %vm555, %v1436, 0
        %v1489 = vsel %vm555, %v1437, 0
        %v1492 = vsel %vm555, %v1438, 0
        %v1495 = vsel %vm555, %v1439, 0
        %1497 = vmatpush.msra.mxu0 0.0
        %1498 = vmatpush.msra.mxu0 0.0
        %1499 = vmatpush.msra.mxu0 0.0
        %1500 = vmatpush.msra.mxu0 0.0
        %1501 = vmatpush.msra.mxu0 0.0
        %1502 = vmatpush.msra.mxu0 0.0
        %1503 = vmatpush.msra.mxu0 0.0
        %1504 = vmatpush.msra.mxu0 0.0
        %1505 = vmatpush.msra.mxu0 %v1204
        %1506 = vmatpush.msra.mxu0 %v1201
        %1507 = vmatpush.msra.mxu0 %v1198
        %1508 = vmatpush.msra.mxu0 %v1195
        %1509 = vmatpush.msra.mxu0 %v1192
        %1510 = vmatpush.msra.mxu0 %v1189
        %1511 = vmatpush.msra.mxu0 %v1186
        %1512 = vmatpush.msra.mxu0 %v1183
        %1513 = vmatmul.f32.gmra.mxu0 %v1486
        %v1514 = vpop.f32.mrf.mxu0
        %v1515 = vadd.f32 %v1474, %v1514
        %1516 = vmatmul.f32.gmra.mxu0 %v1489
        %v1517 = vpop.f32.mrf.mxu0
        %v1518 = vadd.f32 %v1477, %v1517
        %1519 = vmatmul.f32.gmra.mxu0 %v1492
        %v1520 = vpop.f32.mrf.mxu0
        %v1521 = vadd.f32 %v1480, %v1520
        %1522 = vmatmul.f32.gmra.mxu0 %v1495
        %v1523 = vpop.f32.mrf.mxu0
        %v1524 = vadd.f32 %v1483, %v1523
        %1525 = vdwg.mxu0
        %v1526 = vld [vmem:[#allocation14] sm:$0xff]
        %v1527 = vld [vmem:[#allocation14 + $0x8] sm:$0xff]
        %v1528 = vld [vmem:[#allocation14 + $0x10] sm:$0xff]
        %v1529 = vld [vmem:[#allocation14 + $0x18] sm:$0xff]
        %v1531 = vsel %vm555, %v1526, 0
        %v1534 = vsel %vm555, %v1527, 0
        %v1537 = vsel %vm555, %v1528, 0
        %v1540 = vsel %vm555, %v1529, 0
        %1542 = vmatpush.msra.mxu0 0.0
        %1543 = vmatpush.msra.mxu0 0.0
        %1544 = vmatpush.msra.mxu0 0.0
        %1545 = vmatpush.msra.mxu0 0.0
        %1546 = vmatpush.msra.mxu0 0.0
        %1547 = vmatpush.msra.mxu0 0.0
        %1548 = vmatpush.msra.mxu0 0.0
        %1549 = vmatpush.msra.mxu0 0.0
        %1550 = vmatpush.msra.mxu0 %v1434
        %1551 = vmatpush.msra.mxu0 %v1431
        %1552 = vmatpush.msra.mxu0 %v1428
        %1553 = vmatpush.msra.mxu0 %v1425
        %1554 = vmatpush.msra.mxu0 %v1422
        %1555 = vmatpush.msra.mxu0 %v1419
        %1556 = vmatpush.msra.mxu0 %v1416
        %1557 = vmatpush.msra.mxu0 %v1413
        %1558 = vmatmul.f32.gmra.mxu0 %v1531
        %v1559 = vpop.f32.mrf.mxu0
        %v1560 = vadd.f32 0.0, %v1559
        %1561 = vmatmul.f32.gmra.mxu0 %v1534
        %v1562 = vpop.f32.mrf.mxu0
        %v1563 = vadd.f32 0.0, %v1562
        %1564 = vmatmul.f32.gmra.mxu0 %v1537
        %v1565 = vpop.f32.mrf.mxu0
        %v1566 = vadd.f32 0.0, %v1565
        %1567 = vmatmul.f32.gmra.mxu0 %v1540
        %v1568 = vpop.f32.mrf.mxu0
        %v1569 = vadd.f32 0.0, %v1568
        %1570 = vdwg.mxu0
        %v1571 = vadd.f32 %v1515, %v1560
        %v1572 = vadd.f32 %v1518, %v1563
        %v1573 = vadd.f32 %v1521, %v1566
        %v1574 = vadd.f32 %v1524, %v1569
        %1575 = vmatpush.msra.mxu0 0.0
        %1576 = vmatpush.msra.mxu0 0.0
        %1577 = vmatpush.msra.mxu0 0.0
        %1578 = vmatpush.msra.mxu0 0.0
        %1579 = vmatpush.msra.mxu0 0.0
        %1580 = vmatpush.msra.mxu0 0.0
        %1581 = vmatpush.msra.mxu0 0.0
        %1582 = vmatpush.msra.mxu0 0.0
        %1583 = vmatpush.msra.mxu0 %v546
        %1584 = vmatpush.msra.mxu0 %v545
        %1585 = vmatpush.msra.mxu0 %v544
        %1586 = vmatpush.msra.mxu0 %v543
        %1587 = vmatpush.msra.mxu0 %v542
        %1588 = vmatpush.msra.mxu0 %v541
        %1589 = vmatpush.msra.mxu0 %v540
        %1590 = vmatpush.msra.mxu0 %v539
        %1591 = vmatmul.f32.gmra.mxu0 %v1445
        %v1592 = vpop.f32.mrf.mxu0
        %v1593 = vadd.f32 0.0, %v1592
        %1594 = vmatmul.f32.gmra.mxu0 %v1448
        %v1595 = vpop.f32.mrf.mxu0
        %v1596 = vadd.f32 0.0, %v1595
        %1597 = vmatmul.f32.gmra.mxu0 %v1451
        %v1598 = vpop.f32.mrf.mxu0
        %v1599 = vadd.f32 0.0, %v1598
        %1600 = vmatmul.f32.gmra.mxu0 %v1454
        %v1601 = vpop.f32.mrf.mxu0
        %v1602 = vadd.f32 0.0, %v1601
        %1603 = vdwg.mxu0
        %v1604 = vld [vmem:[#allocation16] sm:$0xff]
        %v1605 = vld [vmem:[#allocation16 + $0x8] sm:$0xff]
        %v1606 = vld [vmem:[#allocation16 + $0x10] sm:$0xff]
        %v1607 = vld [vmem:[#allocation16 + $0x18] sm:$0xff]
        %v1608 = vld [vmem:[#allocation16 + $0x20] sm:$0xff]
        %v1609 = vld [vmem:[#allocation16 + $0x28] sm:$0xff]
        %v1610 = vld [vmem:[#allocation16 + $0x30] sm:$0xff]
        %v1611 = vld [vmem:[#allocation16 + $0x38] sm:$0xff]
        %v1612 = vld [vmem:[#allocation16 + $0x40] sm:$0xff]
        %v1613 = vld [vmem:[#allocation16 + $0x48] sm:$0xff]
        %v1614 = vld [vmem:[#allocation16 + $0x50] sm:$0xff]
        %v1615 = vld [vmem:[#allocation16 + $0x58] sm:$0xff]
        %v1616 = vld [vmem:[#allocation16 + $0x60] sm:$0xff]
        %v1617 = vld [vmem:[#allocation16 + $0x68] sm:$0xff]
        %v1618 = vld [vmem:[#allocation16 + $0x70] sm:$0xff]
        %v1619 = vld [vmem:[#allocation16 + $0x78] sm:$0xff]
        %1620 = vmatpush.msra.mxu0 %v1619
        %1621 = vmatpush.msra.mxu0 %v1618
        %1622 = vmatpush.msra.mxu0 %v1617
        %1623 = vmatpush.msra.mxu0 %v1616
        %1624 = vmatpush.msra.mxu0 %v1615
        %1625 = vmatpush.msra.mxu0 %v1614
        %1626 = vmatpush.msra.mxu0 %v1613
        %1627 = vmatpush.msra.mxu0 %v1612
        %1628 = vmatpush.msra.mxu0 %v1611
        %1629 = vmatpush.msra.mxu0 %v1610
        %1630 = vmatpush.msra.mxu0 %v1609
        %1631 = vmatpush.msra.mxu0 %v1608
        %1632 = vmatpush.msra.mxu0 %v1607
        %1633 = vmatpush.msra.mxu0 %v1606
        %1634 = vmatpush.msra.mxu0 %v1605
        %1635 = vmatpush.msra.mxu0 %v1604
        %1636 = vmatmul.f32.gmra.mxu0 %v1593
        %v1637 = vpop.f32.mrf.mxu0
        %v1638 = vadd.f32 0.0, %v1637
        %1639 = vmatmul.f32.gmra.mxu0 %v1596
        %v1640 = vpop.f32.mrf.mxu0
        %v1641 = vadd.f32 0.0, %v1640
        %1642 = vmatmul.f32.gmra.mxu0 %v1599
        %v1643 = vpop.f32.mrf.mxu0
        %v1644 = vadd.f32 0.0, %v1643
        %1645 = vmatmul.f32.gmra.mxu0 %v1602
        %v1646 = vpop.f32.mrf.mxu0
        %v1647 = vadd.f32 0.0, %v1646
        %1648 = vdwg.mxu0
        %v1649 = vadd.f32 %v1571, %v1638
        %v1650 = vadd.f32 %v1572, %v1641
        %v1651 = vadd.f32 %v1573, %v1644
        %v1652 = vadd.f32 %v1574, %v1647
        %v1653 = vld [vmem:[%s10] sm:$0x1]
        %v1655 = vperm.slane %v1653, 0
        %v1657 = vadd.f32 %v1649, %v1655
        %v1658 = vadd.f32 %v1650, %v1655
        %v1659 = vadd.f32 %v1651, %v1655
        %v1660 = vadd.f32 %v1652, %v1655
        %1661 = vst [vmem:[%s538] sm:$0xff] %v1657
        %1662 = vst [vmem:[%s538 + $0x8] sm:$0xff] %v1658
        %1663 = vst [vmem:[%s538 + $0x10] sm:$0xff] %v1659
        %1664 = vst [vmem:[%s538 + $0x18] sm:$0xff] %v1660
        %s1665 = sand.u32 %s276, 1
        %s1666 = scalar_lea.sflag [#allocation4], %s1665
        %s1667 = sand.u32 %s276, 1
        %s1668 = smul.addr %s1667, 32
        %s1669 = scalar_lea.vmem [#allocation17], %s1668
        // Predicated region
        $region101: #{tpu_custom_call.1} parent=63 // pred_check
          %p1670 = pneg %p286
        $region102: #{tpu_custom_call.1} parent=63 // pred_check_branch
          %1672 = sbr.rel (%p1670) target = $region104
        $region103: #{tpu_custom_call.1} parent=63 // pred_region
          %1674 = vsyncadd %s1666, 0
          %s1675 = smul.addr %s32, 4
          %s1676 = smul.addr %s1675, 8
          %s1677 = scalar_lea.hbm %s11, %s1676
          %s1678 = sshll.u32 %s1669, 4
          %s1679 = int_to_ptr.vmem [resolvable:$true] %s1678
          %s1680 = sshll.u32 %s1677, 4
          %s1681 = int_to_ptr.hbm [resolvable:$true] %s1680
          %1686 = dma.vmem_to_hbm [thread:$0]  %s1679, 512, %s1681, %s1666, 128, 128, 8
        $region104: #{tpu_custom_call.1} parent=63 // pred_fallthru
          _
      $region64: #{tpu_custom_call.1} parent=5 // pred_fallthru
        _
      %p1687 = scmp.le.s32.totalorder 2, %s27
      // Predicated region
      $region105: #{tpu_custom_call.1} parent=5 // pred_check
        %p1688 = pneg %p1687
      $region106: #{tpu_custom_call.1} parent=5 // pred_check_branch
        %1690 = sbr.rel (%p1688) target = $region108
      $region107: #{tpu_custom_call.1} parent=5 // pred_region
        %s1691 = ssub.s32 %s27, 2
        // Predicated region
        $region109: #{tpu_custom_call.1} parent=107 // pred_check
          %p1692 = pneg %p292
        $region110: #{tpu_custom_call.1} parent=107 // pred_check_branch
          %1694 = sbr.rel (%p1692) target = $region112
        $region111: #{tpu_custom_call.1} parent=107 // pred_region
          %s1695 = sand.u32 %s277, 1
          %s1696 = scalar_lea.sflag [#allocation4], %s1695
          %s1697 = sand.u32 %s277, 1
          %s1698 = smul.addr %s1697, 32
          %s1699 = scalar_lea.vmem [#allocation17], %s1698
          %1701 = dma.done %s1696, 512
        $region112: #{tpu_custom_call.1} parent=107 // pred_fallthru
          _
      $region108: #{tpu_custom_call.1} parent=5 // pred_fallthru
        _
    $region6: #{tpu_custom_call.1} parent=1 // loop_footer
      %s31 = sadd.s32 1, %s27
    $region7: #{tpu_custom_call.1} parent=1 // loop_footer_branch
      %26 = sbr.rel target = $region3
    $region8: #{tpu_custom_call.1} parent=1 // loop_exit
      _
    %1702 = vsyncpa [#allocation3], 1
    %s1703 = scalar_lea.sflag [#allocation3], 1
    %1704 = vsyncpa %s1703, 1
    %1705 = vsyncpa [#allocation6], 1
    %1706 = vsyncpa [#allocation9], 1
    %1707 = vsyncpa [#allocation12], 1
    %1708 = vsyncpa [#allocation15], 1
    %1709 = vsyncpa [#allocation4], 1
    %s1710 = scalar_lea.sflag [#allocation4], 1
    %1711 = vsyncpa %s1710, 1

</llo_original>
